<compile_context>
chip_gen: v7x
topology: tpu7x:2x2x1
jax: 0.10.0
libtpu: 0.0.40
codegen_flags: <defaults>
</compile_context>

<pallas_src>
import functools

import jax
import jax.numpy as jnp
from jax import lax
from jax.experimental import pallas as pl
from jax.experimental.pallas import tpu as pltpu

N_EMBD = 384          # n_embd from the module
HEAD_SIZE = 64        # head_size constructor arg
BLOCK_SIZE = 256      # causal-mask buffer size (T must be <= BLOCK_SIZE)


def _head_kernel(x_ref, w_ref, o_ref):
    # x_ref: (Bb, T, C) f32, w_ref: (C, 3H) bf16, o_ref: (Bb, T, H) f32
    Bb, T, C = x_ref.shape
    H = HEAD_SIZE

    # ---- Fused QKV projection: one wide bf16 matmul, f32 accumulation ----
    x = x_ref[...].reshape(Bb * T, C).astype(jnp.bfloat16)
    qkv = jnp.dot(x, w_ref[...], preferred_element_type=jnp.float32)        # (Bb*T, 3H) f32
    qkv = qkv.reshape(Bb, T, 3 * H)

    scale = jnp.float32(H) ** jnp.float32(-0.5)                             # k.shape[-1] ** -0.5
    q = (qkv[:, :, 0:H] * scale).astype(jnp.bfloat16)                       # fold scale into q
    k = qkv[:, :, H:2 * H].astype(jnp.bfloat16)
    v = qkv[:, :, 2 * H:3 * H].astype(jnp.bfloat16)

    # ---- Scores: contract last dims directly (no explicit transpose of k) ----
    wei = jnp.einsum('bqd,bkd->bqk', q, k,
                     preferred_element_type=jnp.float32)                    # (Bb, T, T) f32

    # ---- Causal mask + numerically stable softmax, all in f32 ----
    row = lax.broadcasted_iota(jnp.int32, (T, T), 0)
    col = lax.broadcasted_iota(jnp.int32, (T, T), 1)
    causal = (col <= row)[None, :, :]                                       # (1, T, T)
    wei = jnp.where(causal, wei, -jnp.inf)
    wei = jnp.exp(wei - jnp.max(wei, axis=-1, keepdims=True))
    wei = wei * pl.reciprocal(jnp.sum(wei, axis=-1, keepdims=True), approx=True)

    # TODO(synk): nn.Dropout(0.2) is identity in eval mode; training-mode dropout would
    # use pltpu.prng_seed / pltpu.prng_random_bits on `wei` here.

    out = jnp.einsum('bqk,bkd->bqd', wei.astype(jnp.bfloat16), v,
                     preferred_element_type=jnp.float32)                    # (Bb, T, H) f32
    o_ref[...] = out.astype(o_ref.dtype)


def _pick_block_batch(B, target=4):
    """Largest divisor of B that is <= target while keeping >= 2 grid steps when B >= 2
    (so both v7x TensorCores get work)."""
    bb = max(1, min(target, B))
    while bb > 1 and (B // bb) < 2:
        bb -= 1
    while B % bb:
        bb -= 1
    return bb


@functools.partial(jax.jit, static_argnames=("block_batch",))
def head_forward(x, wk, wq, wv, *, block_batch=4):
    """x: (B, T, C) float32; wk/wq/wv: (C, H) float32 -> (B, T, H) float32."""
    B, T, C = x.shape
    H = wk.shape[1]
    assert C == N_EMBD and T <= BLOCK_SIZE and H == HEAD_SIZE

    # Fuse the three projection weights into a single (C, 3H) operand, pre-cast to bf16.
    # Order: [q | k | v] along the output (lane) axis.
    w_qkv = jnp.concatenate([wq, wk, wv], axis=1).astype(jnp.bfloat16)      # (C, 3H)

    Bb = _pick_block_batch(B, block_batch)
    grid = (B // Bb,)

    # NOTE: output lane width H=64 < 128 forces masked stores; if multiple heads existed
    # they should be fused into one kernel with a lane-dense (>=128) output. Single head here.
    return pl.pallas_call(
        _head_kernel,
        out_shape=jax.ShapeDtypeStruct((B, T, H), x.dtype),
        grid_spec=pltpu.PrefetchScalarGridSpec(
            num_scalar_prefetch=0,
            grid=grid,
            in_specs=[
                pl.BlockSpec((Bb, T, C), lambda b: (b, 0, 0)),
                pl.BlockSpec((C, 3 * H), lambda b: (0, 0)),   # resident across grid steps
            ],
            out_specs=pl.BlockSpec((Bb, T, H), lambda b: (b, 0, 0)),
        ),
        compiler_params=pltpu.CompilerParams(
            dimension_semantics=("parallel",),
        ),
    )(x, w_qkv)


def _reference(x, wk, wq, wv):
    # Pure-f32 reference mirroring the PyTorch module (eval mode, dropout = identity).
    k = x @ wk
    q = x @ wq
    v = x @ wv
    wei = (q @ jnp.swapaxes(k, -2, -1)) * (HEAD_SIZE ** -0.5)
    T = x.shape[1]
    tril = jnp.tril(jnp.ones((T, T), dtype=bool))
    wei = jnp.where(tril, wei, -jnp.inf)
    wei = jax.nn.softmax(wei, axis=-1)
    return wei @ v


if __name__ == "__main__":
    B, T = 4, 128   # small sequence, T <= block_size(=256)
    key = jax.random.PRNGKey(0)
    kx, kk, kq, kv = jax.random.split(key, 4)

    x = jax.random.normal(kx, (B, T, N_EMBD), dtype=jnp.float32)
    # Deterministic "Linear(bias=False)" weights, stored as (C, H).
    wk = jax.random.normal(kk, (N_EMBD, HEAD_SIZE), dtype=jnp.float32) * (N_EMBD ** -0.5)
    wq = jax.random.normal(kq, (N_EMBD, HEAD_SIZE), dtype=jnp.float32) * (N_EMBD ** -0.5)
    wv = jax.random.normal(kv, (N_EMBD, HEAD_SIZE), dtype=jnp.float32) * (N_EMBD ** -0.5)

    out = head_forward(x, wk, wq, wv)
    jax.block_until_ready(out)

    ref = _reference(x, wk, wq, wv)
    assert out.shape == (B, T, HEAD_SIZE)
    # bf16 MXU inputs with f32 accumulation vs. pure-f32 reference -> loosened tolerance.
    assert jnp.allclose(out, ref, atol=5e-2, rtol=5e-2), "mismatch vs reference"

    print("KERNEL_OK")
</pallas_src>

<mosaic_0001>
module attributes {stable_mosaic.version = 11 : i64} {
  func.func @_head_kernel(%arg0: i32, %arg1: memref<2x128x384xf32, #tpu.memory_space<vmem>>, %arg2: memref<384x192xbf16, #tpu.memory_space<vmem>>, %arg3: memref<2x128x64xf32, #tpu.memory_space<vmem>>) attributes {dimension_semantics = [#tpu.dimension_semantics<parallel>], iteration_bounds = array<i64: 2>, scalar_prefetch = 0 : i64, scratch_operands = 0 : i64, tpu.core_type = #tpu.core_type<tc>, window_params = [{transform_indices = @transform_0, window_bounds = array<i64: 2, 128, 384>}, {pipeline_mode = #tpu.pipeline_mode<synchronous>, transform_indices = @transform_1, window_bounds = array<i64: 384, 192>}, {transform_indices = @transform_2, window_bounds = array<i64: 2, 128, 64>}]} {
    %c0 = arith.constant 0 : index
    %c0_0 = arith.constant 0 : index
    %c0_1 = arith.constant 0 : index
    %0 = vector.load %arg1[%c0, %c0_0, %c0_1] : memref<2x128x384xf32, #tpu.memory_space<vmem>>, vector<2x128x384xf32>
    %1 = vector.shape_cast %0 : vector<2x128x384xf32> to vector<256x384xf32>
    %2 = arith.truncf %1 : vector<256x384xf32> to vector<256x384xbf16>
    %c0_2 = arith.constant 0 : index
    %c0_3 = arith.constant 0 : index
    %3 = vector.load %arg2[%c0_2, %c0_3] : memref<384x192xbf16, #tpu.memory_space<vmem>>, vector<384x192xbf16>
    %cst = arith.constant dense<0.000000e+00> : vector<256x192xf32>
    %4 = tpu.matmul %2, %3, %cst {dimension_numbers = #tpu.dot_dimension_numbers<[1], [0], [0], [1], [0, 0, 1, 1], [], []>} : vector<256x384xbf16>, vector<384x192xbf16>, vector<256x192xf32> -> vector<256x192xf32>
    %5 = vector.shape_cast %4 : vector<256x192xf32> to vector<2x128x192xf32>
    %cst_4 = arith.constant 6.400000e+01 : f32
    %cst_5 = arith.constant -5.000000e-01 : f32
    %6 = math.powf %cst_4, %cst_5 : f32
    %7 = vector.extract_strided_slice %5 {offsets = [0, 0, 0], sizes = [2, 128, 64], strides = [1, 1, 1]} : vector<2x128x192xf32> to vector<2x128x64xf32>
    %8 = vector.broadcast %6 : f32 to vector<2x128x64xf32>
    %9 = arith.mulf %7, %8 : vector<2x128x64xf32>
    %10 = arith.truncf %9 : vector<2x128x64xf32> to vector<2x128x64xbf16>
    %11 = vector.extract_strided_slice %5 {offsets = [0, 0, 64], sizes = [2, 128, 64], strides = [1, 1, 1]} : vector<2x128x192xf32> to vector<2x128x64xf32>
    %12 = arith.truncf %11 : vector<2x128x64xf32> to vector<2x128x64xbf16>
    %13 = vector.extract_strided_slice %5 {offsets = [0, 0, 128], sizes = [2, 128, 64], strides = [1, 1, 1]} : vector<2x128x192xf32> to vector<2x128x64xf32>
    %14 = arith.truncf %13 : vector<2x128x64xf32> to vector<2x128x64xbf16>
    "tpu.trace_start"() <{level = 10 : i32, message = "bqd,bkd->bqk"}> : () -> ()
    %cst_6 = arith.constant dense<0.000000e+00> : vector<2x128x128xf32>
    %15 = tpu.matmul %10, %12, %cst_6 {dimension_numbers = #tpu.dot_dimension_numbers<[2], [2], [1], [1], [0, 0, 0, 1, 1, 1], [0], [0]>} : vector<2x128x64xbf16>, vector<2x128x64xbf16>, vector<2x128x128xf32> -> vector<2x128x128xf32>
    "tpu.trace_stop"() : () -> ()
    %16 = tpu.iota {dimensions = array<i32: 0>} : vector<128x128xi32>
    %17 = tpu.iota {dimensions = array<i32: 1>} : vector<128x128xi32>
    %18 = arith.cmpi sle, %17, %16 : vector<128x128xi32>
    %19 = vector.shape_cast %18 : vector<128x128xi1> to vector<1x128x128xi1>
    %cst_7 = arith.constant 0xFF800000 : f32
    %20 = vector.shape_cast %19 : vector<1x128x128xi1> to vector<1x128x128xi1>
    %21 = vector.broadcast %20 : vector<1x128x128xi1> to vector<2x128x128xi1>
    %22 = vector.broadcast %cst_7 : f32 to vector<2x128x128xf32>
    %23 = arith.select %21, %15, %22 : vector<2x128x128xi1>, vector<2x128x128xf32>
    %cst_8 = arith.constant dense<0xFF800000> : vector<2x128xf32>
    %24 = vector.multi_reduction <maximumf>, %23, %cst_8 [2] : vector<2x128x128xf32> to vector<2x128xf32>
    %25 = vector.shape_cast %24 : vector<2x128xf32> to vector<2x128x1xf32>
    %26 = vector.broadcast %25 : vector<2x128x1xf32> to vector<2x128x128xf32>
    %27 = arith.subf %23, %26 : vector<2x128x128xf32>
    %28 = math.exp %27 : vector<2x128x128xf32>
    %cst_9 = arith.constant dense<0.000000e+00> : vector<2x128xf32>
    %29 = vector.multi_reduction <add>, %28, %cst_9 [2] : vector<2x128x128xf32> to vector<2x128xf32>
    %30 = vector.shape_cast %29 : vector<2x128xf32> to vector<2x128x1xf32>
    %31 = tpu.reciprocal %30 {approx = true} : vector<2x128x1xf32> -> vector<2x128x1xf32>
    %32 = vector.broadcast %31 : vector<2x128x1xf32> to vector<2x128x128xf32>
    %33 = arith.mulf %28, %32 : vector<2x128x128xf32>
    %34 = arith.truncf %33 : vector<2x128x128xf32> to vector<2x128x128xbf16>
    "tpu.trace_start"() <{level = 10 : i32, message = "bqk,bkd->bqd"}> : () -> ()
    %cst_10 = arith.constant dense<0.000000e+00> : vector<2x128x64xf32>
    %35 = tpu.matmul %34, %14, %cst_10 {dimension_numbers = #tpu.dot_dimension_numbers<[2], [1], [1], [2], [0, 0, 0, 1, 1, 2], [0], [0]>} : vector<2x128x128xbf16>, vector<2x128x64xbf16>, vector<2x128x64xf32> -> vector<2x128x64xf32>
    "tpu.trace_stop"() : () -> ()
    %c0_11 = arith.constant 0 : index
    %c0_12 = arith.constant 0 : index
    %c0_13 = arith.constant 0 : index
    %36 = vector.load %arg3[%c0_11, %c0_12, %c0_13] : memref<2x128x64xf32, #tpu.memory_space<vmem>>, vector<2x128x64xf32>
    tpu.vector_store %arg3[%c0_11, %c0_12, %c0_13], %35 {strides = array<i32>} : memref<2x128x64xf32, #tpu.memory_space<vmem>>, vector<2x128x64xf32>,
    return
  }
  func.func @transform_0(%arg0: i32) -> (i32, i32, i32) {
    %c0_i32 = arith.constant 0 : i32
    %c0_i32_0 = arith.constant 0 : i32
    %c0_i32_1 = arith.constant 0 : i32
    return %arg0, %c0_i32, %c0_i32_0 : i32, i32, i32
  }
  func.func @transform_1(%arg0: i32) -> (i32, i32) {
    %c0_i32 = arith.constant 0 : i32
    %c0_i32_0 = arith.constant 0 : i32
    %c0_i32_1 = arith.constant 0 : i32
    return %c0_i32, %c0_i32_0 : i32, i32
  }
  func.func @transform_2(%arg0: i32) -> (i32, i32, i32) {
    %c0_i32 = arith.constant 0 : i32
    %c0_i32_0 = arith.constant 0 : i32
    %c0_i32_1 = arith.constant 0 : i32
    return %arg0, %c0_i32, %c0_i32_0 : i32, i32, i32
  }
}

</mosaic_0001>

<llo_original>
// kernel: head_forward.1
$region0: #{head_forward.1}
  #allocation0 [shape = 'u32[]', space=smem, size = 0x4, offset = 0x4, fixed_abs, tag = 'smem constant byte address 0x4 - core index']
  #allocation1 [shape = 'u32[144,128]{1,0:T(1,128)}', space=vmem, size = 0x12000, scoped, tag = 'internal scratch']
  %s0 = inlined_call_operand.vmem [shape: f32[4,128,384], index: 0, kind: input, shape index: {}]
  %s1 = inlined_call_operand.vmem [shape: bf16[384,192], index: 1, kind: input, shape index: {}]
  %s2 = inlined_call_operand.vmem [shape: f32[4,128,64], index: 2, kind: output, shape index: {}]
  %s3 = sld [smem:[#allocation0]]
  $region41: #{head_forward.1} parent=0
    _
  %s5 = ssub.s32 1, %s3
  %s6 = scalar_select 0, %s5, %s3
  loop: start=0, step=1, limit=4
  $region2: #{head_forward.1} parent=0 // loop_pre_header
    _
  $region3: #{head_forward.1} parent=0 // loop_header
    %s8 = sphi 0, %s12
    %p9 = scmp.ge.s32.totalorder %s8, 4
    %s18 = sphi 0, %s20
    %s21 = sphi 0, %s18
    %s22 = sphi 0, %s21
    %s38 = sphi 0, %s22
    %s42 = sphi 0, %s42
    %s44 = sphi 0, %s42
    %s45 = sphi 0, %s44
    %s59 = sphi 0, %s45
    %s65 = sphi 0, %s67
    %s68 = sphi 0, %s65
    %s69 = sphi 0, %s68
    %s85 = sphi 0, %s69
  $region4: #{head_forward.1} parent=0 // loop_header_branch
    %11 = sbr.rel (%p9) target = $region8
  $region5: #{head_forward.1} parent=0 // loop_body
    %s13 = ssub.s32 %s8, 1
    %s14 = ssub.s32 %s8, 2
    %s15 = sadd.s32 %s8, 1
    %s16 = ssub.s32 %s8, %s15
    %p17 = scmp.eq.s32.totalorder %s16, 0
    %s19 = sadd.s32 %s18, 1
    %s20 = scalar_select %p17, %s18, %s19
    %p23 = pneg %p17
    %p24 = scmp.eq.s32.totalorder %s8, 1
    %p25 = por %p23, %p24
    %p26 = scmp.ne.s32.totalorder %s18, %s21
    %p27 = scmp.eq.s32.totalorder %s8, 0
    %p28 = por %p26, %p27
    %p29 = scmp.ne.s32.totalorder %s18, %s21
    %p30 = scmp.eq.s32.totalorder %s13, 1
    %p31 = por %p29, %p30
    %p32 = scmp.ne.s32.totalorder %s21, %s22
    %p33 = scmp.eq.s32.totalorder %s13, 0
    %p34 = por %p32, %p33
    %p35 = scmp.ne.s32.totalorder %s21, %s22
    %p36 = scmp.eq.s32.totalorder %s14, 1
    %p37 = por %p35, %p36
    %p39 = scmp.ne.s32.totalorder %s22, %s38
    %p40 = scmp.eq.s32.totalorder %s14, 0
    %p41 = por %p39, %p40
    %s43 = sadd.s32 %s42, 1
    %p46 = scmp.eq.s32.totalorder %s8, 1
    %p47 = scmp.ne.s32.totalorder %s42, %s44
    %p48 = scmp.eq.s32.totalorder %s8, 0
    %p49 = por %p47, %p48
    %p50 = scmp.ne.s32.totalorder %s42, %s44
    %p51 = scmp.eq.s32.totalorder %s13, 1
    %p52 = por %p50, %p51
    %p53 = scmp.ne.s32.totalorder %s44, %s45
    %p54 = scmp.eq.s32.totalorder %s13, 0
    %p55 = por %p53, %p54
    %p56 = scmp.ne.s32.totalorder %s44, %s45
    %p57 = scmp.eq.s32.totalorder %s14, 1
    %p58 = por %p56, %p57
    %p60 = scmp.ne.s32.totalorder %s45, %s59
    %p61 = scmp.eq.s32.totalorder %s14, 0
    %p62 = por %p60, %p61
    %s63 = ssub.s32 %s8, %s15
    %p64 = scmp.eq.s32.totalorder %s63, 0
    %s66 = sadd.s32 %s65, 1
    %s67 = scalar_select %p64, %s65, %s66
    %p70 = pneg %p64
    %p71 = scmp.eq.s32.totalorder %s8, 1
    %p72 = por %p70, %p71
    %p73 = scmp.ne.s32.totalorder %s65, %s68
    %p74 = scmp.eq.s32.totalorder %s8, 0
    %p75 = por %p73, %p74
    %p76 = scmp.ne.s32.totalorder %s65, %s68
    %p77 = scmp.eq.s32.totalorder %s13, 1
    %p78 = por %p76, %p77
    %p79 = scmp.ne.s32.totalorder %s68, %s69
    %p80 = scmp.eq.s32.totalorder %s13, 0
    %p81 = por %p79, %p80
    %p82 = scmp.ne.s32.totalorder %s68, %s69
    %p83 = scmp.eq.s32.totalorder %s14, 1
    %p84 = por %p82, %p83
    %p86 = scmp.ne.s32.totalorder %s69, %s85
    %p87 = scmp.eq.s32.totalorder %s14, 0
    %p88 = por %p86, %p87
    %p89 = scmp.le.s32.totalorder 1, %s8
    %p90 = scmp.lt.s32.totalorder %s8, 3
    %p91 = pnand %p89, %p90
    %p92 = pneg %p91
    // Predicated region
    $region9: #{head_forward.1} parent=5 // pred_check
      _
    $region10: #{head_forward.1} parent=5 // pred_check_branch
      %94 = sbr.rel (%p91) target = $region12
    $region11: #{head_forward.1} parent=5 // pred_region
      %s95 = ssub.s32 %s8, 1
      // Predicated region
      $region13: #{head_forward.1} parent=11 // pred_check
        %p96 = pneg %p55
      $region14: #{head_forward.1} parent=11 // pred_check_branch
        %98 = sbr.rel (%p96) target = $region16
      $region15: #{head_forward.1} parent=11 // pred_region
        _
      $region16: #{head_forward.1} parent=11 // pred_fallthru
        _
    $region12: #{head_forward.1} parent=5 // pred_fallthru
      _
    %p99 = scmp.lt.s32.totalorder %s8, 2
    // Predicated region
    $region17: #{head_forward.1} parent=5 // pred_check
      %p100 = pneg %p99
    $region18: #{head_forward.1} parent=5 // pred_check_branch
      %102 = sbr.rel (%p100) target = $region20
    $region19: #{head_forward.1} parent=5 // pred_region
      // Predicated region
      $region21: #{head_forward.1} parent=19 // pred_check
        %p103 = pneg %p28
      $region22: #{head_forward.1} parent=19 // pred_check_branch
        %105 = sbr.rel (%p103) target = $region24
      $region23: #{head_forward.1} parent=19 // pred_region
        %s106 = smul.u32 2, %s8
        %p107 = scmp.lt.s32.totalorder %s106, 3
        %s108 = scalar_select %p107, %s106, 3
        %s109 = smul.addr %s108, 48
        %s110 = smul.addr %s109, 8
        %s111 = scalar_lea.vmem %s0, %s110
        %s112 = smul.u32 2, %s8
      $region24: #{head_forward.1} parent=19 // pred_fallthru
        _
    $region20: #{head_forward.1} parent=5 // pred_fallthru
      _
    %p113 = scmp.le.s32.totalorder 1, %s8
    %p114 = scmp.lt.s32.totalorder %s8, 3
    %p115 = pnand %p113, %p114
    %p116 = pneg %p115
    // Predicated region
    $region25: #{head_forward.1} parent=5 // pred_check
      _
    $region26: #{head_forward.1} parent=5 // pred_check_branch
      %118 = sbr.rel (%p115) target = $region28
    $region27: #{head_forward.1} parent=5 // pred_region
      %s119 = ssub.s32 %s8, 1
      %s120 = smul.u32 2, %s13
      %p121 = scmp.lt.s32.totalorder %s120, 3
      %s122 = scalar_select %p121, %s120, 3
      %s123 = smul.addr %s122, 48
      %s124 = smul.addr %s123, 8
      %s125 = scalar_lea.vmem %s0, %s124
      %p126 = pneg %p34
      %p127 = pneg %p31
      %p128 = pneg %p55
      %p129 = pneg %p52
      %p130 = pneg %p81
      %p131 = pneg %p78
      %s132 = smul.u32 2, %s13
      %p133 = scmp.lt.s32.totalorder %s132, 3
      %s134 = scalar_select %p133, %s132, 3
      %s135 = smul.addr %s134, 16
      %s136 = smul.addr %s135, 8
      %s137 = scalar_lea.vmem %s2, %s136
      %s138 = smul.u32 2, %s13
      %p139 = scmp.lt.s32.totalorder %s138, 3
      %s140 = scalar_select %p139, %s138, 3
      %s141 = smul.addr %s140, 48
      %s142 = smul.addr %s141, 8
      %s143 = scalar_lea.vmem %s0, %s142
      %s144 = smul.u32 2, %s13
      %s145 = smul.u32 2, %s13
      %p146 = scmp.lt.s32.totalorder %s145, 3
      %s147 = scalar_select %p146, %s145, 3
      %s148 = smul.addr %s147, 16
      %s149 = smul.addr %s148, 8
      %s150 = scalar_lea.vmem %s2, %s149
      %s151 = smul.u32 2, %s13
      %v153 = vld [vmem:[%s143] sm:$0xff]
      %v154 = vld [vmem:[%s143 + $0x8] sm:$0xff]
      %v155 = vld [vmem:[%s143 + $0x10] sm:$0xff]
      %v156 = vld [vmem:[%s143 + $0x18] sm:$0xff]
      %v157 = vld [vmem:[%s143 + $0x20] sm:$0xff]
      %v158 = vld [vmem:[%s143 + $0x28] sm:$0xff]
      %v159 = vld [vmem:[%s143 + $0x30] sm:$0xff]
      %v160 = vld [vmem:[%s143 + $0x38] sm:$0xff]
      %v161 = vld [vmem:[%s143 + $0x40] sm:$0xff]
      %v162 = vld [vmem:[%s143 + $0x48] sm:$0xff]
      %v163 = vld [vmem:[%s143 + $0x50] sm:$0xff]
      %v164 = vld [vmem:[%s143 + $0x58] sm:$0xff]
      %v165 = vld [vmem:[%s143 + $0x60] sm:$0xff]
      %v166 = vld [vmem:[%s143 + $0x68] sm:$0xff]
      %v167 = vld [vmem:[%s143 + $0x70] sm:$0xff]
      %v168 = vld [vmem:[%s143 + $0x78] sm:$0xff]
      %v169 = vld [vmem:[%s143 + $0x80] sm:$0xff]
      %v170 = vld [vmem:[%s143 + $0x88] sm:$0xff]
      %v171 = vld [vmem:[%s143 + $0x90] sm:$0xff]
      %v172 = vld [vmem:[%s143 + $0x98] sm:$0xff]
      %v173 = vld [vmem:[%s143 + $0xa0] sm:$0xff]
      %v174 = vld [vmem:[%s143 + $0xa8] sm:$0xff]
      %v175 = vld [vmem:[%s143 + $0xb0] sm:$0xff]
      %v176 = vld [vmem:[%s143 + $0xb8] sm:$0xff]
      %v177 = vld [vmem:[%s143 + $0xc0] sm:$0xff]
      %v178 = vld [vmem:[%s143 + $0xc8] sm:$0xff]
      %v179 = vld [vmem:[%s143 + $0xd0] sm:$0xff]
      %v180 = vld [vmem:[%s143 + $0xd8] sm:$0xff]
      %v181 = vld [vmem:[%s143 + $0xe0] sm:$0xff]
      %v182 = vld [vmem:[%s143 + $0xe8] sm:$0xff]
      %v183 = vld [vmem:[%s143 + $0xf0] sm:$0xff]
      %v184 = vld [vmem:[%s143 + $0xf8] sm:$0xff]
      %v185 = vld [vmem:[%s143 + $0x100] sm:$0xff]
      %v186 = vld [vmem:[%s143 + $0x108] sm:$0xff]
      %v187 = vld [vmem:[%s143 + $0x110] sm:$0xff]
      %v188 = vld [vmem:[%s143 + $0x118] sm:$0xff]
      %v189 = vld [vmem:[%s143 + $0x120] sm:$0xff]
      %v190 = vld [vmem:[%s143 + $0x128] sm:$0xff]
      %v191 = vld [vmem:[%s143 + $0x130] sm:$0xff]
      %v192 = vld [vmem:[%s143 + $0x138] sm:$0xff]
      %v193 = vld [vmem:[%s143 + $0x140] sm:$0xff]
      %v194 = vld [vmem:[%s143 + $0x148] sm:$0xff]
      %v195 = vld [vmem:[%s143 + $0x150] sm:$0xff]
      %v196 = vld [vmem:[%s143 + $0x158] sm:$0xff]
      %v197 = vld [vmem:[%s143 + $0x160] sm:$0xff]
      %v198 = vld [vmem:[%s143 + $0x168] sm:$0xff]
      %v199 = vld [vmem:[%s143 + $0x170] sm:$0xff]
      %v200 = vld [vmem:[%s143 + $0x178] sm:$0xff]
      %v201 = vld [vmem:[%s143 + $0x180] sm:$0xff]
      %v202 = vld [vmem:[%s143 + $0x188] sm:$0xff]
      %v203 = vld [vmem:[%s143 + $0x190] sm:$0xff]
      %v204 = vld [vmem:[%s143 + $0x198] sm:$0xff]
      %v205 = vld [vmem:[%s143 + $0x1a0] sm:$0xff]
      %v206 = vld [vmem:[%s143 + $0x1a8] sm:$0xff]
      %v207 = vld [vmem:[%s143 + $0x1b0] sm:$0xff]
      %v208 = vld [vmem:[%s143 + $0x1b8] sm:$0xff]
      %v209 = vld [vmem:[%s143 + $0x1c0] sm:$0xff]
      %v210 = vld [vmem:[%s143 + $0x1c8] sm:$0xff]
      %v211 = vld [vmem:[%s143 + $0x1d0] sm:$0xff]
      %v212 = vld [vmem:[%s143 + $0x1d8] sm:$0xff]
      %v213 = vld [vmem:[%s143 + $0x1e0] sm:$0xff]
      %v214 = vld [vmem:[%s143 + $0x1e8] sm:$0xff]
      %v215 = vld [vmem:[%s143 + $0x1f0] sm:$0xff]
      %v216 = vld [vmem:[%s143 + $0x1f8] sm:$0xff]
      %v217 = vld [vmem:[%s143 + $0x200] sm:$0xff]
      %v218 = vld [vmem:[%s143 + $0x208] sm:$0xff]
      %v219 = vld [vmem:[%s143 + $0x210] sm:$0xff]
      %v220 = vld [vmem:[%s143 + $0x218] sm:$0xff]
      %v221 = vld [vmem:[%s143 + $0x220] sm:$0xff]
      %v222 = vld [vmem:[%s143 + $0x228] sm:$0xff]
      %v223 = vld [vmem:[%s143 + $0x230] sm:$0xff]
      %v224 = vld [vmem:[%s143 + $0x238] sm:$0xff]
      %v225 = vld [vmem:[%s143 + $0x240] sm:$0xff]
      %v226 = vld [vmem:[%s143 + $0x248] sm:$0xff]
      %v227 = vld [vmem:[%s143 + $0x250] sm:$0xff]
      %v228 = vld [vmem:[%s143 + $0x258] sm:$0xff]
      %v229 = vld [vmem:[%s143 + $0x260] sm:$0xff]
      %v230 = vld [vmem:[%s143 + $0x268] sm:$0xff]
      %v231 = vld [vmem:[%s143 + $0x270] sm:$0xff]
      %v232 = vld [vmem:[%s143 + $0x278] sm:$0xff]
      %v233 = vld [vmem:[%s143 + $0x280] sm:$0xff]
      %v234 = vld [vmem:[%s143 + $0x288] sm:$0xff]
      %v235 = vld [vmem:[%s143 + $0x290] sm:$0xff]
      %v236 = vld [vmem:[%s143 + $0x298] sm:$0xff]
      %v237 = vld [vmem:[%s143 + $0x2a0] sm:$0xff]
      %v238 = vld [vmem:[%s143 + $0x2a8] sm:$0xff]
      %v239 = vld [vmem:[%s143 + $0x2b0] sm:$0xff]
      %v240 = vld [vmem:[%s143 + $0x2b8] sm:$0xff]
      %v241 = vld [vmem:[%s143 + $0x2c0] sm:$0xff]
      %v242 = vld [vmem:[%s143 + $0x2c8] sm:$0xff]
      %v243 = vld [vmem:[%s143 + $0x2d0] sm:$0xff]
      %v244 = vld [vmem:[%s143 + $0x2d8] sm:$0xff]
      %v245 = vld [vmem:[%s143 + $0x2e0] sm:$0xff]
      %v246 = vld [vmem:[%s143 + $0x2e8] sm:$0xff]
      %v247 = vld [vmem:[%s143 + $0x2f0] sm:$0xff]
      %v248 = vld [vmem:[%s143 + $0x2f8] sm:$0xff]
      %v249 = vpack.c.bf16 %v156, %v153
      %v250 = vpack.c.bf16 %v157, %v154
      %v251 = vpack.c.bf16 %v158, %v155
      %v252 = vpack.c.bf16 %v162, %v159
      %v253 = vpack.c.bf16 %v163, %v160
      %v254 = vpack.c.bf16 %v164, %v161
      %v255 = vpack.c.bf16 %v168, %v165
      %v256 = vpack.c.bf16 %v169, %v166
      %v257 = vpack.c.bf16 %v170, %v167
      %v258 = vpack.c.bf16 %v174, %v171
      %v259 = vpack.c.bf16 %v175, %v172
      %v260 = vpack.c.bf16 %v176, %v173
      %v261 = vpack.c.bf16 %v180, %v177
      %v262 = vpack.c.bf16 %v181, %v178
      %v263 = vpack.c.bf16 %v182, %v179
      %v264 = vpack.c.bf16 %v186, %v183
      %v265 = vpack.c.bf16 %v187, %v184
      %v266 = vpack.c.bf16 %v188, %v185
      %v267 = vpack.c.bf16 %v192, %v189
      %v268 = vpack.c.bf16 %v193, %v190
      %v269 = vpack.c.bf16 %v194, %v191
      %v270 = vpack.c.bf16 %v198, %v195
      %v271 = vpack.c.bf16 %v199, %v196
      %v272 = vpack.c.bf16 %v200, %v197
      %v273 = vpack.c.bf16 %v204, %v201
      %v274 = vpack.c.bf16 %v205, %v202
      %v275 = vpack.c.bf16 %v206, %v203
      %v276 = vpack.c.bf16 %v210, %v207
      %v277 = vpack.c.bf16 %v211, %v208
      %v278 = vpack.c.bf16 %v212, %v209
      %v279 = vpack.c.bf16 %v216, %v213
      %v280 = vpack.c.bf16 %v217, %v214
      %v281 = vpack.c.bf16 %v218, %v215
      %v282 = vpack.c.bf16 %v222, %v219
      %v283 = vpack.c.bf16 %v223, %v220
      %v284 = vpack.c.bf16 %v224, %v221
      %v285 = vpack.c.bf16 %v228, %v225
      %v286 = vpack.c.bf16 %v229, %v226
      %v287 = vpack.c.bf16 %v230, %v227
      %v288 = vpack.c.bf16 %v234, %v231
      %v289 = vpack.c.bf16 %v235, %v232
      %v290 = vpack.c.bf16 %v236, %v233
      %v291 = vpack.c.bf16 %v240, %v237
      %v292 = vpack.c.bf16 %v241, %v238
      %v293 = vpack.c.bf16 %v242, %v239
      %v294 = vpack.c.bf16 %v246, %v243
      %v295 = vpack.c.bf16 %v247, %v244
      %v296 = vpack.c.bf16 %v248, %v245
      %v297 = vld [vmem:[%s1] sm:$0xff]
      %v298 = vld [vmem:[%s1 + $0x8] sm:$0xff]
      %v299 = vld [vmem:[%s1 + $0x10] sm:$0xff]
      %v300 = vld [vmem:[%s1 + $0x18] sm:$0xff]
      %v301 = vld [vmem:[%s1 + $0x20] sm:$0xff]
      %v302 = vld [vmem:[%s1 + $0x28] sm:$0xff]
      %v303 = vld [vmem:[%s1 + $0x30] sm:$0xff]
      %v304 = vld [vmem:[%s1 + $0x38] sm:$0xff]
      %v305 = vld [vmem:[%s1 + $0x40] sm:$0xff]
      %v306 = vld [vmem:[%s1 + $0x48] sm:$0xff]
      %v307 = vld [vmem:[%s1 + $0x50] sm:$0xff]
      %v308 = vld [vmem:[%s1 + $0x58] sm:$0xff]
      %v309 = vld [vmem:[%s1 + $0x60] sm:$0xff]
      %v310 = vld [vmem:[%s1 + $0x68] sm:$0xff]
      %v311 = vld [vmem:[%s1 + $0x70] sm:$0xff]
      %v312 = vld [vmem:[%s1 + $0x78] sm:$0xff]
      %v313 = vld [vmem:[%s1 + $0x80] sm:$0xff]
      %v314 = vld [vmem:[%s1 + $0x88] sm:$0xff]
      %v315 = vld [vmem:[%s1 + $0x90] sm:$0xff]
      %v316 = vld [vmem:[%s1 + $0x98] sm:$0xff]
      %v317 = vld [vmem:[%s1 + $0xa0] sm:$0xff]
      %v318 = vld [vmem:[%s1 + $0xa8] sm:$0xff]
      %v319 = vld [vmem:[%s1 + $0xb0] sm:$0xff]
      %v320 = vld [vmem:[%s1 + $0xb8] sm:$0xff]
      %v321 = vld [vmem:[%s1 + $0xc0] sm:$0xff]
      %v322 = vld [vmem:[%s1 + $0xc8] sm:$0xff]
      %v323 = vld [vmem:[%s1 + $0xd0] sm:$0xff]
      %v324 = vld [vmem:[%s1 + $0xd8] sm:$0xff]
      %v325 = vld [vmem:[%s1 + $0xe0] sm:$0xff]
      %v326 = vld [vmem:[%s1 + $0xe8] sm:$0xff]
      %v327 = vld [vmem:[%s1 + $0xf0] sm:$0xff]
      %v328 = vld [vmem:[%s1 + $0xf8] sm:$0xff]
      %v329 = vld [vmem:[%s1 + $0x100] sm:$0xff]
      %v330 = vld [vmem:[%s1 + $0x108] sm:$0xff]
      %v331 = vld [vmem:[%s1 + $0x110] sm:$0xff]
      %v332 = vld [vmem:[%s1 + $0x118] sm:$0xff]
      %v333 = vld [vmem:[%s1 + $0x120] sm:$0xff]
      %v334 = vld [vmem:[%s1 + $0x128] sm:$0xff]
      %v335 = vld [vmem:[%s1 + $0x130] sm:$0xff]
      %v336 = vld [vmem:[%s1 + $0x138] sm:$0xff]
      %v337 = vld [vmem:[%s1 + $0x140] sm:$0xff]
      %v338 = vld [vmem:[%s1 + $0x148] sm:$0xff]
      %v339 = vld [vmem:[%s1 + $0x150] sm:$0xff]
      %v340 = vld [vmem:[%s1 + $0x158] sm:$0xff]
      %v341 = vld [vmem:[%s1 + $0x160] sm:$0xff]
      %v342 = vld [vmem:[%s1 + $0x168] sm:$0xff]
      %v343 = vld [vmem:[%s1 + $0x170] sm:$0xff]
      %v344 = vld [vmem:[%s1 + $0x178] sm:$0xff]
      %v393 = vunpack.c.l.b16 %v297
      %v394 = vunpack.c.h.b16 %v297
      %v395 = vunpack.c.l.b16 %v298
      %v396 = vunpack.c.h.b16 %v298
      %v397 = vunpack.c.l.b16 %v299
      %v398 = vunpack.c.h.b16 %v299
      %v399 = vunpack.c.l.b16 %v300
      %v400 = vunpack.c.h.b16 %v300
      %v401 = vunpack.c.l.b16 %v301
      %v402 = vunpack.c.h.b16 %v301
      %v403 = vunpack.c.l.b16 %v302
      %v404 = vunpack.c.h.b16 %v302
      %v405 = vunpack.c.l.b16 %v303
      %v406 = vunpack.c.h.b16 %v303
      %v407 = vunpack.c.l.b16 %v304
      %v408 = vunpack.c.h.b16 %v304
      %v409 = vunpack.c.l.b16 %v305
      %v410 = vunpack.c.h.b16 %v305
      %v411 = vunpack.c.l.b16 %v306
      %v412 = vunpack.c.h.b16 %v306
      %v413 = vunpack.c.l.b16 %v307
      %v414 = vunpack.c.h.b16 %v307
      %v415 = vunpack.c.l.b16 %v308
      %v416 = vunpack.c.h.b16 %v308
      %v417 = vunpack.c.l.b16 %v309
      %v418 = vunpack.c.h.b16 %v309
      %v419 = vunpack.c.l.b16 %v310
      %v420 = vunpack.c.h.b16 %v310
      %v421 = vunpack.c.l.b16 %v311
      %v422 = vunpack.c.h.b16 %v311
      %v423 = vunpack.c.l.b16 %v312
      %v424 = vunpack.c.h.b16 %v312
      %v425 = vunpack.c.l.b16 %v313
      %v426 = vunpack.c.h.b16 %v313
      %v427 = vunpack.c.l.b16 %v314
      %v428 = vunpack.c.h.b16 %v314
      %v429 = vunpack.c.l.b16 %v315
      %v430 = vunpack.c.h.b16 %v315
      %v431 = vunpack.c.l.b16 %v316
      %v432 = vunpack.c.h.b16 %v316
      %v433 = vunpack.c.l.b16 %v317
      %v434 = vunpack.c.h.b16 %v317
      %v435 = vunpack.c.l.b16 %v318
      %v436 = vunpack.c.h.b16 %v318
      %v437 = vunpack.c.l.b16 %v319
      %v438 = vunpack.c.h.b16 %v319
      %v439 = vunpack.c.l.b16 %v320
      %v440 = vunpack.c.h.b16 %v320
      %v441 = vunpack.c.l.b16 %v321
      %v442 = vunpack.c.h.b16 %v321
      %v443 = vunpack.c.l.b16 %v322
      %v444 = vunpack.c.h.b16 %v322
      %v445 = vunpack.c.l.b16 %v323
      %v446 = vunpack.c.h.b16 %v323
      %v447 = vunpack.c.l.b16 %v324
      %v448 = vunpack.c.h.b16 %v324
      %v449 = vunpack.c.l.b16 %v325
      %v450 = vunpack.c.h.b16 %v325
      %v451 = vunpack.c.l.b16 %v326
      %v452 = vunpack.c.h.b16 %v326
      %v453 = vunpack.c.l.b16 %v327
      %v454 = vunpack.c.h.b16 %v327
      %v455 = vunpack.c.l.b16 %v328
      %v456 = vunpack.c.h.b16 %v328
      %v457 = vunpack.c.l.b16 %v329
      %v458 = vunpack.c.h.b16 %v329
      %v459 = vunpack.c.l.b16 %v330
      %v460 = vunpack.c.h.b16 %v330
      %v461 = vunpack.c.l.b16 %v331
      %v462 = vunpack.c.h.b16 %v331
      %v463 = vunpack.c.l.b16 %v332
      %v464 = vunpack.c.h.b16 %v332
      %v465 = vunpack.c.l.b16 %v333
      %v466 = vunpack.c.h.b16 %v333
      %v467 = vunpack.c.l.b16 %v334
      %v468 = vunpack.c.h.b16 %v334
      %v469 = vunpack.c.l.b16 %v335
      %v470 = vunpack.c.h.b16 %v335
      %v471 = vunpack.c.l.b16 %v336
      %v472 = vunpack.c.h.b16 %v336
      %v473 = vunpack.c.l.b16 %v337
      %v474 = vunpack.c.h.b16 %v337
      %v475 = vunpack.c.l.b16 %v338
      %v476 = vunpack.c.h.b16 %v338
      %v477 = vunpack.c.l.b16 %v339
      %v478 = vunpack.c.h.b16 %v339
      %v479 = vunpack.c.l.b16 %v340
      %v480 = vunpack.c.h.b16 %v340
      %v481 = vunpack.c.l.b16 %v341
      %v482 = vunpack.c.h.b16 %v341
      %v483 = vunpack.c.l.b16 %v342
      %v484 = vunpack.c.h.b16 %v342
      %v485 = vunpack.c.l.b16 %v343
      %v486 = vunpack.c.h.b16 %v343
      %v487 = vunpack.c.l.b16 %v344
      %v488 = vunpack.c.h.b16 %v344
      %v489 = vpack.c.b16 %v395, %v393
      %v490 = vpack.c.b16 %v396, %v394
      %v491 = vpack.c.b16 %v399, %v397
      %v492 = vpack.c.b16 %v400, %v398
      %v493 = vpack.c.b16 %v403, %v401
      %v494 = vpack.c.b16 %v404, %v402
      %v495 = vpack.c.b16 %v407, %v405
      %v496 = vpack.c.b16 %v408, %v406
      %v497 = vpack.c.b16 %v411, %v409
      %v498 = vpack.c.b16 %v412, %v410
      %v499 = vpack.c.b16 %v415, %v413
      %v500 = vpack.c.b16 %v416, %v414
      %v501 = vpack.c.b16 %v419, %v417
      %v502 = vpack.c.b16 %v420, %v418
      %v503 = vpack.c.b16 %v423, %v421
      %v504 = vpack.c.b16 %v424, %v422
      %v505 = vpack.c.b16 %v427, %v425
      %v506 = vpack.c.b16 %v428, %v426
      %v507 = vpack.c.b16 %v431, %v429
      %v508 = vpack.c.b16 %v432, %v430
      %v509 = vpack.c.b16 %v435, %v433
      %v510 = vpack.c.b16 %v436, %v434
      %v511 = vpack.c.b16 %v439, %v437
      %v512 = vpack.c.b16 %v440, %v438
      %v513 = vpack.c.b16 %v443, %v441
      %v514 = vpack.c.b16 %v444, %v442
      %v515 = vpack.c.b16 %v447, %v445
      %v516 = vpack.c.b16 %v448, %v446
      %v517 = vpack.c.b16 %v451, %v449
      %v518 = vpack.c.b16 %v452, %v450
      %v519 = vpack.c.b16 %v455, %v453
      %v520 = vpack.c.b16 %v456, %v454
      %v521 = vpack.c.b16 %v459, %v457
      %v522 = vpack.c.b16 %v460, %v458
      %v523 = vpack.c.b16 %v463, %v461
      %v524 = vpack.c.b16 %v464, %v462
      %v525 = vpack.c.b16 %v467, %v465
      %v526 = vpack.c.b16 %v468, %v466
      %v527 = vpack.c.b16 %v471, %v469
      %v528 = vpack.c.b16 %v472, %v470
      %v529 = vpack.c.b16 %v475, %v473
      %v530 = vpack.c.b16 %v476, %v474
      %v531 = vpack.c.b16 %v479, %v477
      %v532 = vpack.c.b16 %v480, %v478
      %v533 = vpack.c.b16 %v483, %v481
      %v534 = vpack.c.b16 %v484, %v482
      %v535 = vpack.c.b16 %v487, %v485
      %v536 = vpack.c.b16 %v488, %v486
      %585 = vmatprep.subr.bf16.mxu0 %v490
      %586 = vmatpush1.bf16.msra.mxu0 %v489
      %587 = vmatprep.subr.bf16.mxu0 %v492
      %588 = vmatpush1.bf16.msra.mxu0 %v491
      %589 = vmatprep.subr.bf16.mxu0 %v494
      %590 = vmatpush1.bf16.msra.mxu0 %v493
      %591 = vmatprep.subr.bf16.mxu0 %v496
      %592 = vmatpush1.bf16.msra.mxu0 %v495
      %593 = vmatprep.subr.bf16.mxu0 %v498
      %594 = vmatpush1.bf16.msra.mxu0 %v497
      %595 = vmatprep.subr.bf16.mxu0 %v500
      %596 = vmatpush1.bf16.msra.mxu0 %v499
      %597 = vmatprep.subr.bf16.mxu0 %v502
      %598 = vmatpush1.bf16.msra.mxu0 %v501
      %599 = vmatprep.subr.bf16.mxu0 %v504
      %600 = vmatpush1.bf16.msra.mxu0 %v503
      %601 = vmatprep.subr.bf16.mxu0 %v506
      %602 = vmatpush1.bf16.msra.mxu0 %v505
      %603 = vmatprep.subr.bf16.mxu0 %v508
      %604 = vmatpush1.bf16.msra.mxu0 %v507
      %605 = vmatprep.subr.bf16.mxu0 %v510
      %606 = vmatpush1.bf16.msra.mxu0 %v509
      %607 = vmatprep.subr.bf16.mxu0 %v512
      %608 = vmatpush1.bf16.msra.mxu0 %v511
      %609 = vmatprep.subr.bf16.mxu0 %v514
      %610 = vmatpush1.bf16.msra.mxu0 %v513
      %611 = vmatprep.subr.bf16.mxu0 %v516
      %612 = vmatpush1.bf16.msra.mxu0 %v515
      %613 = vmatprep.subr.bf16.mxu0 %v518
      %614 = vmatpush1.bf16.msra.mxu0 %v517
      %615 = vmatprep.subr.bf16.mxu0 %v520
      %616 = vmatpush1.bf16.msra.mxu0 %v519
      %617 = vmatprep.mubr.bf16.mxu0 %v250
      %618 = vmatmul.mubr.bf16.gmra.mrb[0].mxu0 %v249
      %v619 = vpop.f32.mrb[0].mxu0
      %v620 = vadd.f32 0.0, %v619
      %v621 = vpop.f32.mrb[0].mxu0
      %v622 = vadd.f32 0.0, %v621
      %v623 = vpop.f32.mrb[0].mxu0
      %v624 = vadd.f32 0.0, %v623
      %v625 = vpop.f32.mrb[0].mxu0
      %v626 = vadd.f32 0.0, %v625
      %627 = vmatprep.mubr.bf16.mxu0 %v253
      %628 = vmatmul.mubr.bf16.gmra.mrb[0].mxu0 %v252
      %v629 = vpop.f32.mrb[0].mxu0
      %v630 = vadd.f32 0.0, %v629
      %v631 = vpop.f32.mrb[0].mxu0
      %v632 = vadd.f32 0.0, %v631
      %v633 = vpop.f32.mrb[0].mxu0
      %v634 = vadd.f32 0.0, %v633
      %v635 = vpop.f32.mrb[0].mxu0
      %v636 = vadd.f32 0.0, %v635
      %637 = vmatprep.mubr.bf16.mxu0 %v256
      %638 = vmatmul.mubr.bf16.gmra.mrb[0].mxu0 %v255
      %v639 = vpop.f32.mrb[0].mxu0
      %v640 = vadd.f32 0.0, %v639
      %v641 = vpop.f32.mrb[0].mxu0
      %v642 = vadd.f32 0.0, %v641
      %v643 = vpop.f32.mrb[0].mxu0
      %v644 = vadd.f32 0.0, %v643
      %v645 = vpop.f32.mrb[0].mxu0
      %v646 = vadd.f32 0.0, %v645
      %647 = vmatprep.mubr.bf16.mxu0 %v259
      %648 = vmatmul.mubr.bf16.gmra.mrb[0].mxu0 %v258
      %v649 = vpop.f32.mrb[0].mxu0
      %v650 = vadd.f32 0.0, %v649
      %v651 = vpop.f32.mrb[0].mxu0
      %v652 = vadd.f32 0.0, %v651
      %v653 = vpop.f32.mrb[0].mxu0
      %v654 = vadd.f32 0.0, %v653
      %v655 = vpop.f32.mrb[0].mxu0
      %v656 = vadd.f32 0.0, %v655
      %657 = vmatprep.mubr.bf16.mxu0 %v262
      %658 = vmatmul.mubr.bf16.gmra.mrb[0].mxu0 %v261
      %v659 = vpop.f32.mrb[0].mxu0
      %v660 = vadd.f32 0.0, %v659
      %v661 = vpop.f32.mrb[0].mxu0
      %v662 = vadd.f32 0.0, %v661
      %v663 = vpop.f32.mrb[0].mxu0
      %v664 = vadd.f32 0.0, %v663
      %v665 = vpop.f32.mrb[0].mxu0
      %v666 = vadd.f32 0.0, %v665
      %667 = vmatprep.mubr.bf16.mxu0 %v265
      %668 = vmatmul.mubr.bf16.gmra.mrb[0].mxu0 %v264
      %v669 = vpop.f32.mrb[0].mxu0
      %v670 = vadd.f32 0.0, %v669
      %v671 = vpop.f32.mrb[0].mxu0
      %v672 = vadd.f32 0.0, %v671
      %v673 = vpop.f32.mrb[0].mxu0
      %v674 = vadd.f32 0.0, %v673
      %v675 = vpop.f32.mrb[0].mxu0
      %v676 = vadd.f32 0.0, %v675
      %677 = vmatprep.mubr.bf16.mxu0 %v268
      %678 = vmatmul.mubr.bf16.gmra.mrb[0].mxu0 %v267
      %v679 = vpop.f32.mrb[0].mxu0
      %v680 = vadd.f32 0.0, %v679
      %v681 = vpop.f32.mrb[0].mxu0
      %v682 = vadd.f32 0.0, %v681
      %v683 = vpop.f32.mrb[0].mxu0
      %v684 = vadd.f32 0.0, %v683
      %v685 = vpop.f32.mrb[0].mxu0
      %v686 = vadd.f32 0.0, %v685
      %687 = vmatprep.mubr.bf16.mxu0 %v271
      %688 = vmatmul.mubr.bf16.gmra.mrb[0].mxu0 %v270
      %v689 = vpop.f32.mrb[0].mxu0
      %v690 = vadd.f32 0.0, %v689
      %v691 = vpop.f32.mrb[0].mxu0
      %v692 = vadd.f32 0.0, %v691
      %v693 = vpop.f32.mrb[0].mxu0
      %v694 = vadd.f32 0.0, %v693
      %v695 = vpop.f32.mrb[0].mxu0
      %v696 = vadd.f32 0.0, %v695
      %697 = vmatprep.mubr.bf16.mxu0 %v274
      %698 = vmatmul.mubr.bf16.gmra.mrb[0].mxu0 %v273
      %v699 = vpop.f32.mrb[0].mxu0
      %v700 = vadd.f32 0.0, %v699
      %v701 = vpop.f32.mrb[0].mxu0
      %v702 = vadd.f32 0.0, %v701
      %v703 = vpop.f32.mrb[0].mxu0
      %v704 = vadd.f32 0.0, %v703
      %v705 = vpop.f32.mrb[0].mxu0
      %v706 = vadd.f32 0.0, %v705
      %707 = vmatprep.mubr.bf16.mxu0 %v277
      %708 = vmatmul.mubr.bf16.gmra.mrb[0].mxu0 %v276
      %v709 = vpop.f32.mrb[0].mxu0
      %v710 = vadd.f32 0.0, %v709
      %v711 = vpop.f32.mrb[0].mxu0
      %v712 = vadd.f32 0.0, %v711
      %v713 = vpop.f32.mrb[0].mxu0
      %v714 = vadd.f32 0.0, %v713
      %v715 = vpop.f32.mrb[0].mxu0
      %v716 = vadd.f32 0.0, %v715
      %717 = vmatprep.mubr.bf16.mxu0 %v280
      %718 = vmatmul.mubr.bf16.gmra.mrb[0].mxu0 %v279
      %v719 = vpop.f32.mrb[0].mxu0
      %v720 = vadd.f32 0.0, %v719
      %v721 = vpop.f32.mrb[0].mxu0
      %v722 = vadd.f32 0.0, %v721
      %v723 = vpop.f32.mrb[0].mxu0
      %v724 = vadd.f32 0.0, %v723
      %v725 = vpop.f32.mrb[0].mxu0
      %v726 = vadd.f32 0.0, %v725
      %727 = vmatprep.mubr.bf16.mxu0 %v283
      %728 = vmatmul.mubr.bf16.gmra.mrb[0].mxu0 %v282
      %v729 = vpop.f32.mrb[0].mxu0
      %v730 = vadd.f32 0.0, %v729
      %v731 = vpop.f32.mrb[0].mxu0
      %v732 = vadd.f32 0.0, %v731
      %v733 = vpop.f32.mrb[0].mxu0
      %v734 = vadd.f32 0.0, %v733
      %v735 = vpop.f32.mrb[0].mxu0
      %v736 = vadd.f32 0.0, %v735
      %737 = vmatprep.mubr.bf16.mxu0 %v286
      %738 = vmatmul.mubr.bf16.gmra.mrb[0].mxu0 %v285
      %v739 = vpop.f32.mrb[0].mxu0
      %v740 = vadd.f32 0.0, %v739
      %v741 = vpop.f32.mrb[0].mxu0
      %v742 = vadd.f32 0.0, %v741
      %v743 = vpop.f32.mrb[0].mxu0
      %v744 = vadd.f32 0.0, %v743
      %v745 = vpop.f32.mrb[0].mxu0
      %v746 = vadd.f32 0.0, %v745
      %747 = vmatprep.mubr.bf16.mxu0 %v289
      %748 = vmatmul.mubr.bf16.gmra.mrb[0].mxu0 %v288
      %v749 = vpop.f32.mrb[0].mxu0
      %v750 = vadd.f32 0.0, %v749
      %v751 = vpop.f32.mrb[0].mxu0
      %v752 = vadd.f32 0.0, %v751
      %v753 = vpop.f32.mrb[0].mxu0
      %v754 = vadd.f32 0.0, %v753
      %v755 = vpop.f32.mrb[0].mxu0
      %v756 = vadd.f32 0.0, %v755
      %757 = vmatprep.mubr.bf16.mxu0 %v292
      %758 = vmatmul.mubr.bf16.gmra.mrb[0].mxu0 %v291
      %v759 = vpop.f32.mrb[0].mxu0
      %v760 = vadd.f32 0.0, %v759
      %v761 = vpop.f32.mrb[0].mxu0
      %v762 = vadd.f32 0.0, %v761
      %v763 = vpop.f32.mrb[0].mxu0
      %v764 = vadd.f32 0.0, %v763
      %v765 = vpop.f32.mrb[0].mxu0
      %v766 = vadd.f32 0.0, %v765
      %767 = vmatprep.mubr.bf16.mxu0 %v295
      %768 = vmatmul.mubr.bf16.gmra.mrb[0].mxu0 %v294
      %v769 = vpop.f32.mrb[0].mxu0
      %v770 = vadd.f32 0.0, %v769
      %v771 = vpop.f32.mrb[0].mxu0
      %v772 = vadd.f32 0.0, %v771
      %v773 = vpop.f32.mrb[0].mxu0
      %v774 = vadd.f32 0.0, %v773
      %v775 = vpop.f32.mrb[0].mxu0
      %v776 = vadd.f32 0.0, %v775
      %777 = vdwg.mxu0
      %778 = vmatprep.subr.bf16.mxu0 %v522
      %779 = vmatpush1.bf16.msra.mxu0 %v521
      %780 = vmatprep.subr.bf16.mxu0 %v524
      %781 = vmatpush1.bf16.msra.mxu0 %v523
      %782 = vmatprep.subr.bf16.mxu0 %v526
      %783 = vmatpush1.bf16.msra.mxu0 %v525
      %784 = vmatprep.subr.bf16.mxu0 %v528
      %785 = vmatpush1.bf16.msra.mxu0 %v527
      %786 = vmatprep.subr.bf16.mxu0 %v530
      %787 = vmatpush1.bf16.msra.mxu0 %v529
      %788 = vmatprep.subr.bf16.mxu0 %v532
      %789 = vmatpush1.bf16.msra.mxu0 %v531
      %790 = vmatprep.subr.bf16.mxu0 %v534
      %791 = vmatpush1.bf16.msra.mxu0 %v533
      %792 = vmatprep.subr.bf16.mxu0 %v536
      %793 = vmatpush1.bf16.msra.mxu0 %v535
      %794 = vmatprep.subr.bf16.mxu0 0
      %795 = vmatpush1.bf16.msra.mxu0 0
      %796 = vmatprep.subr.bf16.mxu0 0
      %797 = vmatpush1.bf16.msra.mxu0 0
      %798 = vmatprep.subr.bf16.mxu0 0
      %799 = vmatpush1.bf16.msra.mxu0 0
      %800 = vmatprep.subr.bf16.mxu0 0
      %801 = vmatpush1.bf16.msra.mxu0 0
      %802 = vmatprep.subr.bf16.mxu0 0
      %803 = vmatpush1.bf16.msra.mxu0 0
      %804 = vmatprep.subr.bf16.mxu0 0
      %805 = vmatpush1.bf16.msra.mxu0 0
      %806 = vmatprep.subr.bf16.mxu0 0
      %807 = vmatpush1.bf16.msra.mxu0 0
      %808 = vmatprep.subr.bf16.mxu0 0
      %809 = vmatpush1.bf16.msra.mxu0 0
      %810 = vmatprep.mubr.bf16.mxu0 0
      %811 = vmatmul.mubr.bf16.gmra.mrb[0].mxu0 %v251
      %v812 = vpop.f32.mrb[0].mxu0
      %v813 = vadd.f32 %v620, %v812
      %v814 = vpop.f32.mrb[0].mxu0
      %v815 = vadd.f32 %v622, %v814
      %v816 = vpop.f32.mrb[0].mxu0
      %v817 = vadd.f32 %v624, %v816
      %v818 = vpop.f32.mrb[0].mxu0
      %v819 = vadd.f32 %v626, %v818
      %820 = vmatprep.mubr.bf16.mxu0 0
      %821 = vmatmul.mubr.bf16.gmra.mrb[0].mxu0 %v254
      %v822 = vpop.f32.mrb[0].mxu0
      %v823 = vadd.f32 %v630, %v822
      %v824 = vpop.f32.mrb[0].mxu0
      %v825 = vadd.f32 %v632, %v824
      %v826 = vpop.f32.mrb[0].mxu0
      %v827 = vadd.f32 %v634, %v826
      %v828 = vpop.f32.mrb[0].mxu0
      %v829 = vadd.f32 %v636, %v828
      %830 = vmatprep.mubr.bf16.mxu0 0
      %831 = vmatmul.mubr.bf16.gmra.mrb[0].mxu0 %v257
      %v832 = vpop.f32.mrb[0].mxu0
      %v833 = vadd.f32 %v640, %v832
      %v834 = vpop.f32.mrb[0].mxu0
      %v835 = vadd.f32 %v642, %v834
      %v836 = vpop.f32.mrb[0].mxu0
      %v837 = vadd.f32 %v644, %v836
      %v838 = vpop.f32.mrb[0].mxu0
      %v839 = vadd.f32 %v646, %v838
      %840 = vmatprep.mubr.bf16.mxu0 0
      %841 = vmatmul.mubr.bf16.gmra.mrb[0].mxu0 %v260
      %v842 = vpop.f32.mrb[0].mxu0
      %v843 = vadd.f32 %v650, %v842
      %v844 = vpop.f32.mrb[0].mxu0
      %v845 = vadd.f32 %v652, %v844
      %v846 = vpop.f32.mrb[0].mxu0
      %v847 = vadd.f32 %v654, %v846
      %v848 = vpop.f32.mrb[0].mxu0
      %v849 = vadd.f32 %v656, %v848
      %850 = vmatprep.mubr.bf16.mxu0 0
      %851 = vmatmul.mubr.bf16.gmra.mrb[0].mxu0 %v263
      %v852 = vpop.f32.mrb[0].mxu0
      %v853 = vadd.f32 %v660, %v852
      %v854 = vpop.f32.mrb[0].mxu0
      %v855 = vadd.f32 %v662, %v854
      %v856 = vpop.f32.mrb[0].mxu0
      %v857 = vadd.f32 %v664, %v856
      %v858 = vpop.f32.mrb[0].mxu0
      %v859 = vadd.f32 %v666, %v858
      %860 = vmatprep.mubr.bf16.mxu0 0
      %861 = vmatmul.mubr.bf16.gmra.mrb[0].mxu0 %v266
      %v862 = vpop.f32.mrb[0].mxu0
      %v863 = vadd.f32 %v670, %v862
      %v864 = vpop.f32.mrb[0].mxu0
      %v865 = vadd.f32 %v672, %v864
      %v866 = vpop.f32.mrb[0].mxu0
      %v867 = vadd.f32 %v674, %v866
      %v868 = vpop.f32.mrb[0].mxu0
      %v869 = vadd.f32 %v676, %v868
      %870 = vmatprep.mubr.bf16.mxu0 0
      %871 = vmatmul.mubr.bf16.gmra.mrb[0].mxu0 %v269
      %v872 = vpop.f32.mrb[0].mxu0
      %v873 = vadd.f32 %v680, %v872
      %v874 = vpop.f32.mrb[0].mxu0
      %v875 = vadd.f32 %v682, %v874
      %v876 = vpop.f32.mrb[0].mxu0
      %v877 = vadd.f32 %v684, %v876
      %v878 = vpop.f32.mrb[0].mxu0
      %v879 = vadd.f32 %v686, %v878
      %880 = vmatprep.mubr.bf16.mxu0 0
      %881 = vmatmul.mubr.bf16.gmra.mrb[0].mxu0 %v272
      %v882 = vpop.f32.mrb[0].mxu0
      %v883 = vadd.f32 %v690, %v882
      %v884 = vpop.f32.mrb[0].mxu0
      %v885 = vadd.f32 %v692, %v884
      %v886 = vpop.f32.mrb[0].mxu0
      %v887 = vadd.f32 %v694, %v886
      %v888 = vpop.f32.mrb[0].mxu0
      %v889 = vadd.f32 %v696, %v888
      %890 = vmatprep.mubr.bf16.mxu0 0
      %891 = vmatmul.mubr.bf16.gmra.mrb[0].mxu0 %v275
      %v892 = vpop.f32.mrb[0].mxu0
      %v893 = vadd.f32 %v700, %v892
      %v894 = vpop.f32.mrb[0].mxu0
      %v895 = vadd.f32 %v702, %v894
      %v896 = vpop.f32.mrb[0].mxu0
      %v897 = vadd.f32 %v704, %v896
      %v898 = vpop.f32.mrb[0].mxu0
      %v899 = vadd.f32 %v706, %v898
      %900 = vmatprep.mubr.bf16.mxu0 0
      %901 = vmatmul.mubr.bf16.gmra.mrb[0].mxu0 %v278
      %v902 = vpop.f32.mrb[0].mxu0
      %v903 = vadd.f32 %v710, %v902
      %v904 = vpop.f32.mrb[0].mxu0
      %v905 = vadd.f32 %v712, %v904
      %v906 = vpop.f32.mrb[0].mxu0
      %v907 = vadd.f32 %v714, %v906
      %v908 = vpop.f32.mrb[0].mxu0
      %v909 = vadd.f32 %v716, %v908
      %910 = vmatprep.mubr.bf16.mxu0 0
      %911 = vmatmul.mubr.bf16.gmra.mrb[0].mxu0 %v281
      %v912 = vpop.f32.mrb[0].mxu0
      %v913 = vadd.f32 %v720, %v912
      %v914 = vpop.f32.mrb[0].mxu0
      %v915 = vadd.f32 %v722, %v914
      %v916 = vpop.f32.mrb[0].mxu0
      %v917 = vadd.f32 %v724, %v916
      %v918 = vpop.f32.mrb[0].mxu0
      %v919 = vadd.f32 %v726, %v918
      %920 = vmatprep.mubr.bf16.mxu0 0
      %921 = vmatmul.mubr.bf16.gmra.mrb[0].mxu0 %v284
      %v922 = vpop.f32.mrb[0].mxu0
      %v923 = vadd.f32 %v730, %v922
      %v924 = vpop.f32.mrb[0].mxu0
      %v925 = vadd.f32 %v732, %v924
      %v926 = vpop.f32.mrb[0].mxu0
      %v927 = vadd.f32 %v734, %v926
      %v928 = vpop.f32.mrb[0].mxu0
      %v929 = vadd.f32 %v736, %v928
      %930 = vmatprep.mubr.bf16.mxu0 0
      %931 = vmatmul.mubr.bf16.gmra.mrb[0].mxu0 %v287
      %v932 = vpop.f32.mrb[0].mxu0
      %v933 = vadd.f32 %v740, %v932
      %v934 = vpop.f32.mrb[0].mxu0
      %v935 = vadd.f32 %v742, %v934
      %v936 = vpop.f32.mrb[0].mxu0
      %v937 = vadd.f32 %v744, %v936
      %v938 = vpop.f32.mrb[0].mxu0
      %v939 = vadd.f32 %v746, %v938
      %940 = vmatprep.mubr.bf16.mxu0 0
      %941 = vmatmul.mubr.bf16.gmra.mrb[0].mxu0 %v290
      %v942 = vpop.f32.mrb[0].mxu0
      %v943 = vadd.f32 %v750, %v942
      %v944 = vpop.f32.mrb[0].mxu0
      %v945 = vadd.f32 %v752, %v944
      %v946 = vpop.f32.mrb[0].mxu0
      %v947 = vadd.f32 %v754, %v946
      %v948 = vpop.f32.mrb[0].mxu0
      %v949 = vadd.f32 %v756, %v948
      %950 = vmatprep.mubr.bf16.mxu0 0
      %951 = vmatmul.mubr.bf16.gmra.mrb[0].mxu0 %v293
      %v952 = vpop.f32.mrb[0].mxu0
      %v953 = vadd.f32 %v760, %v952
      %v954 = vpop.f32.mrb[0].mxu0
      %v955 = vadd.f32 %v762, %v954
      %v956 = vpop.f32.mrb[0].mxu0
      %v957 = vadd.f32 %v764, %v956
      %v958 = vpop.f32.mrb[0].mxu0
      %v959 = vadd.f32 %v766, %v958
      %960 = vmatprep.mubr.bf16.mxu0 0
      %961 = vmatmul.mubr.bf16.gmra.mrb[0].mxu0 %v296
      %v962 = vpop.f32.mrb[0].mxu0
      %v963 = vadd.f32 %v770, %v962
      %v964 = vpop.f32.mrb[0].mxu0
      %v965 = vadd.f32 %v772, %v964
      %v966 = vpop.f32.mrb[0].mxu0
      %v967 = vadd.f32 %v774, %v966
      %v968 = vpop.f32.mrb[0].mxu0
      %v969 = vadd.f32 %v776, %v968
      %970 = vdwg.mxu0
      %v971 = vmul.f32 %v813, 0.125
      %v972 = vmul.f32 %v817, 0.125
      %v973 = vmul.f32 %v823, 0.125
      %v974 = vmul.f32 %v827, 0.125
      %v975 = vmul.f32 %v833, 0.125
      %v976 = vmul.f32 %v837, 0.125
      %v977 = vmul.f32 %v843, 0.125
      %v978 = vmul.f32 %v847, 0.125
      %v979 = vmul.f32 %v853, 0.125
      %v980 = vmul.f32 %v857, 0.125
      %v981 = vmul.f32 %v863, 0.125
      %v982 = vmul.f32 %v867, 0.125
      %v983 = vmul.f32 %v873, 0.125
      %v984 = vmul.f32 %v877, 0.125
      %v985 = vmul.f32 %v883, 0.125
      %v986 = vmul.f32 %v887, 0.125
      %v987 = vmul.f32 %v893, 0.125
      %v988 = vmul.f32 %v897, 0.125
      %v989 = vmul.f32 %v903, 0.125
      %v990 = vmul.f32 %v907, 0.125
      %v991 = vmul.f32 %v913, 0.125
      %v992 = vmul.f32 %v917, 0.125
      %v993 = vmul.f32 %v923, 0.125
      %v994 = vmul.f32 %v927, 0.125
      %v995 = vmul.f32 %v933, 0.125
      %v996 = vmul.f32 %v937, 0.125
      %v997 = vmul.f32 %v943, 0.125
      %v998 = vmul.f32 %v947, 0.125
      %v999 = vmul.f32 %v953, 0.125
      %v1000 = vmul.f32 %v957, 0.125
      %v1001 = vmul.f32 %v963, 0.125
      %v1002 = vmul.f32 %v967, 0.125
      %v1003 = vpack.c.bf16 %v972, %v971
      %v1004 = vpack.c.bf16 %v974, %v973
      %v1005 = vpack.c.bf16 %v976, %v975
      %v1006 = vpack.c.bf16 %v978, %v977
      %v1007 = vpack.c.bf16 %v980, %v979
      %v1008 = vpack.c.bf16 %v982, %v981
      %v1009 = vpack.c.bf16 %v984, %v983
      %v1010 = vpack.c.bf16 %v986, %v985
      %v1011 = vpack.c.bf16 %v988, %v987
      %v1012 = vpack.c.bf16 %v990, %v989
      %v1013 = vpack.c.bf16 %v992, %v991
      %v1014 = vpack.c.bf16 %v994, %v993
      %v1015 = vpack.c.bf16 %v996, %v995
      %v1016 = vpack.c.bf16 %v998, %v997
      %v1017 = vpack.c.bf16 %v1000, %v999
      %v1018 = vpack.c.bf16 %v1002, %v1001
      %v1019 = vpack.c.bf16 %v817, %v813
      %v1020 = vpack.c.bf16 %v827, %v823
      %v1021 = vpack.c.bf16 %v837, %v833
      %v1022 = vpack.c.bf16 %v847, %v843
      %v1023 = vpack.c.bf16 %v857, %v853
      %v1024 = vpack.c.bf16 %v867, %v863
      %v1025 = vpack.c.bf16 %v877, %v873
      %v1026 = vpack.c.bf16 %v887, %v883
      %v1027 = vpack.c.bf16 %v897, %v893
      %v1028 = vpack.c.bf16 %v907, %v903
      %v1029 = vpack.c.bf16 %v917, %v913
      %v1030 = vpack.c.bf16 %v927, %v923
      %v1031 = vpack.c.bf16 %v937, %v933
      %v1032 = vpack.c.bf16 %v947, %v943
      %v1033 = vpack.c.bf16 %v957, %v953
      %v1034 = vpack.c.bf16 %v967, %v963
      %v1035 = vpack.c.bf16 %v819, %v815
      %v1036 = vpack.c.bf16 %v829, %v825
      %v1037 = vpack.c.bf16 %v839, %v835
      %v1038 = vpack.c.bf16 %v849, %v845
      %v1039 = vpack.c.bf16 %v859, %v855
      %v1040 = vpack.c.bf16 %v869, %v865
      %v1041 = vpack.c.bf16 %v879, %v875
      %v1042 = vpack.c.bf16 %v889, %v885
      %v1043 = vpack.c.bf16 %v899, %v895
      %v1044 = vpack.c.bf16 %v909, %v905
      %v1045 = vpack.c.bf16 %v919, %v915
      %v1046 = vpack.c.bf16 %v929, %v925
      %v1047 = vpack.c.bf16 %v939, %v935
      %v1048 = vpack.c.bf16 %v949, %v945
      %v1049 = vpack.c.bf16 %v959, %v955
      %v1050 = vpack.c.bf16 %v969, %v965
      %1059 = vrot.lane.b32.xlu0 %v1019, 64
      %v1060 = vpop.permute.xlu0 %1059
      %1061 = vrot.lane.b32.xlu0 %v1020, 64
      %v1062 = vpop.permute.xlu0 %1061
      %1063 = vrot.lane.b32.xlu0 %v1021, 64
      %v1064 = vpop.permute.xlu0 %1063
      %1065 = vrot.lane.b32.xlu0 %v1022, 64
      %v1066 = vpop.permute.xlu0 %1065
      %1067 = vrot.lane.b32.xlu0 %v1023, 64
      %v1068 = vpop.permute.xlu0 %1067
      %1069 = vrot.lane.b32.xlu0 %v1024, 64
      %v1070 = vpop.permute.xlu0 %1069
      %1071 = vrot.lane.b32.xlu0 %v1025, 64
      %v1072 = vpop.permute.xlu0 %1071
      %1073 = vrot.lane.b32.xlu0 %v1026, 64
      %v1074 = vpop.permute.xlu0 %1073
      %vm1075 = vcmask 523264
      %v1077 = vsel %vm1075, %v1003, 0
      %v1080 = vsel %vm1075, %v1004, 0
      %v1083 = vsel %vm1075, %v1005, 0
      %v1086 = vsel %vm1075, %v1006, 0
      %v1089 = vsel %vm1075, %v1007, 0
      %v1092 = vsel %vm1075, %v1008, 0
      %v1095 = vsel %vm1075, %v1009, 0
      %v1098 = vsel %vm1075, %v1010, 0
      %v1101 = vsel %vm1075, %v1060, 0
      %v1104 = vsel %vm1075, %v1062, 0
      %v1107 = vsel %vm1075, %v1064, 0
      %v1110 = vsel %vm1075, %v1066, 0
      %v1113 = vsel %vm1075, %v1068, 0
      %v1116 = vsel %vm1075, %v1070, 0
      %v1119 = vsel %vm1075, %v1072, 0
      %v1122 = vsel %vm1075, %v1074, 0
      %1124 = vmatprep.subr.bf16.mxu0 0
      %1125 = vmatpush1.bf16.xpose.msra.mxu0 %v1101
      %1126 = vmatprep.subr.bf16.mxu0 0
      %1127 = vmatpush1.bf16.xpose.msra.mxu0 %v1104
      %1128 = vmatprep.subr.bf16.mxu0 0
      %1129 = vmatpush1.bf16.xpose.msra.mxu0 %v1107
      %1130 = vmatprep.subr.bf16.mxu0 0
      %1131 = vmatpush1.bf16.xpose.msra.mxu0 %v1110
      %1132 = vmatprep.subr.bf16.mxu0 0
      %1133 = vmatpush1.bf16.xpose.msra.mxu0 %v1113
      %1134 = vmatprep.subr.bf16.mxu0 0
      %1135 = vmatpush1.bf16.xpose.msra.mxu0 %v1116
      %1136 = vmatprep.subr.bf16.mxu0 0
      %1137 = vmatpush1.bf16.xpose.msra.mxu0 %v1119
      %1138 = vmatprep.subr.bf16.mxu0 0
      %1139 = vmatpush1.bf16.xpose.msra.mxu0 %v1122
      %1140 = vmatprep.subr.bf16.mxu0 0
      %1141 = vmatpush1.bf16.xpose.msra.mxu0 0
      %1142 = vmatprep.subr.bf16.mxu0 0
      %1143 = vmatpush1.bf16.xpose.msra.mxu0 0
      %1144 = vmatprep.subr.bf16.mxu0 0
      %1145 = vmatpush1.bf16.xpose.msra.mxu0 0
      %1146 = vmatprep.subr.bf16.mxu0 0
      %1147 = vmatpush1.bf16.xpose.msra.mxu0 0
      %1148 = vmatprep.subr.bf16.mxu0 0
      %1149 = vmatpush1.bf16.xpose.msra.mxu0 0
      %1150 = vmatprep.subr.bf16.mxu0 0
      %1151 = vmatpush1.bf16.xpose.msra.mxu0 0
      %1152 = vmatprep.subr.bf16.mxu0 0
      %1153 = vmatpush1.bf16.xpose.msra.mxu0 0
      %1154 = vmatprep.subr.bf16.mxu0 0
      %1155 = vmatpush1.bf16.xpose.msra.mxu0 0
      %1156 = vmatprep.mubr.bf16.mxu0 0
      %1157 = vmatmul.mubr.bf16.gmra.mrb[0].mxu0 %v1077
      %v1158 = vpop.f32.mrb[0].mxu0
      %v1159 = vadd.f32 0.0, %v1158
      %v1160 = vpop.f32.mrb[0].mxu0
      %v1161 = vpop.f32.mrb[0].mxu0
      %v1162 = vadd.f32 0.0, %v1161
      %v1163 = vpop.f32.mrb[0].mxu0
      %1164 = vmatprep.mubr.bf16.mxu0 0
      %1165 = vmatmul.mubr.bf16.gmra.mrb[0].mxu0 %v1080
      %v1166 = vpop.f32.mrb[0].mxu0
      %v1167 = vadd.f32 0.0, %v1166
      %v1168 = vpop.f32.mrb[0].mxu0
      %v1169 = vpop.f32.mrb[0].mxu0
      %v1170 = vadd.f32 0.0, %v1169
      %v1171 = vpop.f32.mrb[0].mxu0
      %1172 = vmatprep.mubr.bf16.mxu0 0
      %1173 = vmatmul.mubr.bf16.gmra.mrb[0].mxu0 %v1083
      %v1174 = vpop.f32.mrb[0].mxu0
      %v1175 = vadd.f32 0.0, %v1174
      %v1176 = vpop.f32.mrb[0].mxu0
      %v1177 = vpop.f32.mrb[0].mxu0
      %v1178 = vadd.f32 0.0, %v1177
      %v1179 = vpop.f32.mrb[0].mxu0
      %1180 = vmatprep.mubr.bf16.mxu0 0
      %1181 = vmatmul.mubr.bf16.gmra.mrb[0].mxu0 %v1086
      %v1182 = vpop.f32.mrb[0].mxu0
      %v1183 = vadd.f32 0.0, %v1182
      %v1184 = vpop.f32.mrb[0].mxu0
      %v1185 = vpop.f32.mrb[0].mxu0
      %v1186 = vadd.f32 0.0, %v1185
      %v1187 = vpop.f32.mrb[0].mxu0
      %1188 = vmatprep.mubr.bf16.mxu0 0
      %1189 = vmatmul.mubr.bf16.gmra.mrb[0].mxu0 %v1089
      %v1190 = vpop.f32.mrb[0].mxu0
      %v1191 = vadd.f32 0.0, %v1190
      %v1192 = vpop.f32.mrb[0].mxu0
      %v1193 = vpop.f32.mrb[0].mxu0
      %v1194 = vadd.f32 0.0, %v1193
      %v1195 = vpop.f32.mrb[0].mxu0
      %1196 = vmatprep.mubr.bf16.mxu0 0
      %1197 = vmatmul.mubr.bf16.gmra.mrb[0].mxu0 %v1092
      %v1198 = vpop.f32.mrb[0].mxu0
      %v1199 = vadd.f32 0.0, %v1198
      %v1200 = vpop.f32.mrb[0].mxu0
      %v1201 = vpop.f32.mrb[0].mxu0
      %v1202 = vadd.f32 0.0, %v1201
      %v1203 = vpop.f32.mrb[0].mxu0
      %1204 = vmatprep.mubr.bf16.mxu0 0
      %1205 = vmatmul.mubr.bf16.gmra.mrb[0].mxu0 %v1095
      %v1206 = vpop.f32.mrb[0].mxu0
      %v1207 = vadd.f32 0.0, %v1206
      %v1208 = vpop.f32.mrb[0].mxu0
      %v1209 = vpop.f32.mrb[0].mxu0
      %v1210 = vadd.f32 0.0, %v1209
      %v1211 = vpop.f32.mrb[0].mxu0
      %1212 = vmatprep.mubr.bf16.mxu0 0
      %1213 = vmatmul.mubr.bf16.gmra.mrb[0].mxu0 %v1098
      %v1214 = vpop.f32.mrb[0].mxu0
      %v1215 = vadd.f32 0.0, %v1214
      %v1216 = vpop.f32.mrb[0].mxu0
      %v1217 = vpop.f32.mrb[0].mxu0
      %v1218 = vadd.f32 0.0, %v1217
      %v1219 = vpop.f32.mrb[0].mxu0
      %1220 = vdwg.mxu0
      %1229 = vrot.lane.b32.xlu0 %v1027, 64
      %v1230 = vpop.permute.xlu0 %1229
      %1231 = vrot.lane.b32.xlu0 %v1028, 64
      %v1232 = vpop.permute.xlu0 %1231
      %1233 = vrot.lane.b32.xlu0 %v1029, 64
      %v1234 = vpop.permute.xlu0 %1233
      %1235 = vrot.lane.b32.xlu0 %v1030, 64
      %v1236 = vpop.permute.xlu0 %1235
      %1237 = vrot.lane.b32.xlu0 %v1031, 64
      %v1238 = vpop.permute.xlu0 %1237
      %1239 = vrot.lane.b32.xlu0 %v1032, 64
      %v1240 = vpop.permute.xlu0 %1239
      %1241 = vrot.lane.b32.xlu0 %v1033, 64
      %v1242 = vpop.permute.xlu0 %1241
      %1243 = vrot.lane.b32.xlu0 %v1034, 64
      %v1244 = vpop.permute.xlu0 %1243
      %v1246 = vsel %vm1075, %v1011, 0
      %v1249 = vsel %vm1075, %v1012, 0
      %v1252 = vsel %vm1075, %v1013, 0
      %v1255 = vsel %vm1075, %v1014, 0
      %v1258 = vsel %vm1075, %v1015, 0
      %v1261 = vsel %vm1075, %v1016, 0
      %v1264 = vsel %vm1075, %v1017, 0
      %v1267 = vsel %vm1075, %v1018, 0
      %v1270 = vsel %vm1075, %v1230, 0
      %v1273 = vsel %vm1075, %v1232, 0
      %v1276 = vsel %vm1075, %v1234, 0
      %v1279 = vsel %vm1075, %v1236, 0
      %v1282 = vsel %vm1075, %v1238, 0
      %v1285 = vsel %vm1075, %v1240, 0
      %v1288 = vsel %vm1075, %v1242, 0
      %v1291 = vsel %vm1075, %v1244, 0
      %1293 = vmatprep.subr.bf16.mxu0 0
      %1294 = vmatpush1.bf16.xpose.msra.mxu0 %v1270
      %1295 = vmatprep.subr.bf16.mxu0 0
      %1296 = vmatpush1.bf16.xpose.msra.mxu0 %v1273
      %1297 = vmatprep.subr.bf16.mxu0 0
      %1298 = vmatpush1.bf16.xpose.msra.mxu0 %v1276
      %1299 = vmatprep.subr.bf16.mxu0 0
      %1300 = vmatpush1.bf16.xpose.msra.mxu0 %v1279
      %1301 = vmatprep.subr.bf16.mxu0 0
      %1302 = vmatpush1.bf16.xpose.msra.mxu0 %v1282
      %1303 = vmatprep.subr.bf16.mxu0 0
      %1304 = vmatpush1.bf16.xpose.msra.mxu0 %v1285
      %1305 = vmatprep.subr.bf16.mxu0 0
      %1306 = vmatpush1.bf16.xpose.msra.mxu0 %v1288
      %1307 = vmatprep.subr.bf16.mxu0 0
      %1308 = vmatpush1.bf16.xpose.msra.mxu0 %v1291
      %1309 = vmatprep.subr.bf16.mxu0 0
      %1310 = vmatpush1.bf16.xpose.msra.mxu0 0
      %1311 = vmatprep.subr.bf16.mxu0 0
      %1312 = vmatpush1.bf16.xpose.msra.mxu0 0
      %1313 = vmatprep.subr.bf16.mxu0 0
      %1314 = vmatpush1.bf16.xpose.msra.mxu0 0
      %1315 = vmatprep.subr.bf16.mxu0 0
      %1316 = vmatpush1.bf16.xpose.msra.mxu0 0
      %1317 = vmatprep.subr.bf16.mxu0 0
      %1318 = vmatpush1.bf16.xpose.msra.mxu0 0
      %1319 = vmatprep.subr.bf16.mxu0 0
      %1320 = vmatpush1.bf16.xpose.msra.mxu0 0
      %1321 = vmatprep.subr.bf16.mxu0 0
      %1322 = vmatpush1.bf16.xpose.msra.mxu0 0
      %1323 = vmatprep.subr.bf16.mxu0 0
      %1324 = vmatpush1.bf16.xpose.msra.mxu0 0
      %1325 = vmatprep.mubr.bf16.mxu0 0
      %1326 = vmatmul.mubr.bf16.gmra.mrb[0].mxu0 %v1246
      %v1327 = vpop.f32.mrb[0].mxu0
      %v1328 = vadd.f32 0.0, %v1327
      %v1329 = vpop.f32.mrb[0].mxu0
      %v1330 = vpop.f32.mrb[0].mxu0
      %v1331 = vadd.f32 0.0, %v1330
      %v1332 = vpop.f32.mrb[0].mxu0
      %1333 = vmatprep.mubr.bf16.mxu0 0
      %1334 = vmatmul.mubr.bf16.gmra.mrb[0].mxu0 %v1249
      %v1335 = vpop.f32.mrb[0].mxu0
      %v1336 = vadd.f32 0.0, %v1335
      %v1337 = vpop.f32.mrb[0].mxu0
      %v1338 = vpop.f32.mrb[0].mxu0
      %v1339 = vadd.f32 0.0, %v1338
      %v1340 = vpop.f32.mrb[0].mxu0
      %1341 = vmatprep.mubr.bf16.mxu0 0
      %1342 = vmatmul.mubr.bf16.gmra.mrb[0].mxu0 %v1252
      %v1343 = vpop.f32.mrb[0].mxu0
      %v1344 = vadd.f32 0.0, %v1343
      %v1345 = vpop.f32.mrb[0].mxu0
      %v1346 = vpop.f32.mrb[0].mxu0
      %v1347 = vadd.f32 0.0, %v1346
      %v1348 = vpop.f32.mrb[0].mxu0
      %1349 = vmatprep.mubr.bf16.mxu0 0
      %1350 = vmatmul.mubr.bf16.gmra.mrb[0].mxu0 %v1255
      %v1351 = vpop.f32.mrb[0].mxu0
      %v1352 = vadd.f32 0.0, %v1351
      %v1353 = vpop.f32.mrb[0].mxu0
      %v1354 = vpop.f32.mrb[0].mxu0
      %v1355 = vadd.f32 0.0, %v1354
      %v1356 = vpop.f32.mrb[0].mxu0
      %1357 = vmatprep.mubr.bf16.mxu0 0
      %1358 = vmatmul.mubr.bf16.gmra.mrb[0].mxu0 %v1258
      %v1359 = vpop.f32.mrb[0].mxu0
      %v1360 = vadd.f32 0.0, %v1359
      %v1361 = vpop.f32.mrb[0].mxu0
      %v1362 = vpop.f32.mrb[0].mxu0
      %v1363 = vadd.f32 0.0, %v1362
      %v1364 = vpop.f32.mrb[0].mxu0
      %1365 = vmatprep.mubr.bf16.mxu0 0
      %1366 = vmatmul.mubr.bf16.gmra.mrb[0].mxu0 %v1261
      %v1367 = vpop.f32.mrb[0].mxu0
      %v1368 = vadd.f32 0.0, %v1367
      %v1369 = vpop.f32.mrb[0].mxu0
      %v1370 = vpop.f32.mrb[0].mxu0
      %v1371 = vadd.f32 0.0, %v1370
      %v1372 = vpop.f32.mrb[0].mxu0
      %1373 = vmatprep.mubr.bf16.mxu0 0
      %1374 = vmatmul.mubr.bf16.gmra.mrb[0].mxu0 %v1264
      %v1375 = vpop.f32.mrb[0].mxu0
      %v1376 = vadd.f32 0.0, %v1375
      %v1377 = vpop.f32.mrb[0].mxu0
      %v1378 = vpop.f32.mrb[0].mxu0
      %v1379 = vadd.f32 0.0, %v1378
      %v1380 = vpop.f32.mrb[0].mxu0
      %1381 = vmatprep.mubr.bf16.mxu0 0
      %1382 = vmatmul.mubr.bf16.gmra.mrb[0].mxu0 %v1267
      %v1383 = vpop.f32.mrb[0].mxu0
      %v1384 = vadd.f32 0.0, %v1383
      %v1385 = vpop.f32.mrb[0].mxu0
      %v1386 = vpop.f32.mrb[0].mxu0
      %v1387 = vadd.f32 0.0, %v1386
      %v1388 = vpop.f32.mrb[0].mxu0
      %1389 = vdwg.mxu0
      %v1390 = vlaneseq
      %v1391 = vshrl.u32 %v1390, 7
      %v1392 = vadd.s32 %v1391, 8
      %v1393 = vadd.s32 %v1391, 16
      %v1394 = vadd.s32 %v1391, 24
      %v1395 = vadd.s32 %v1391, 32
      %v1396 = vadd.s32 %v1391, 40
      %v1397 = vadd.s32 %v1391, 48
      %v1398 = vadd.s32 %v1391, 56
      %v1399 = vadd.s32 %v1391, 64
      %v1400 = vadd.s32 %v1391, 72
      %v1401 = vadd.s32 %v1391, 80
      %v1402 = vadd.s32 %v1391, 88
      %v1403 = vadd.s32 %v1391, 96
      %v1404 = vadd.s32 %v1391, 104
      %v1405 = vadd.s32 %v1391, 112
      %v1406 = vadd.s32 %v1391, 120
      %v1407 = vlaneseq
      %v1408 = vand.u32 %v1407, 127
      %vm1409 = vcmp.le.s32.totalorder %v1408, %v1391
      %vm1410 = vcmp.le.s32.totalorder %v1408, %v1392
      %vm1411 = vcmp.le.s32.totalorder %v1408, %v1393
      %vm1412 = vcmp.le.s32.totalorder %v1408, %v1394
      %vm1413 = vcmp.le.s32.totalorder %v1408, %v1395
      %vm1414 = vcmp.le.s32.totalorder %v1408, %v1396
      %vm1415 = vcmp.le.s32.totalorder %v1408, %v1397
      %vm1416 = vcmp.le.s32.totalorder %v1408, %v1398
      %vm1417 = vcmp.le.s32.totalorder %v1408, %v1399
      %vm1418 = vcmp.le.s32.totalorder %v1408, %v1400
      %vm1419 = vcmp.le.s32.totalorder %v1408, %v1401
      %vm1420 = vcmp.le.s32.totalorder %v1408, %v1402
      %vm1421 = vcmp.le.s32.totalorder %v1408, %v1403
      %vm1422 = vcmp.le.s32.totalorder %v1408, %v1404
      %vm1423 = vcmp.le.s32.totalorder %v1408, %v1405
      %vm1424 = vcmp.le.s32.totalorder %v1408, %v1406
      %v1425 = vsel %vm1409, 1, 0
      %v1426 = vsel %vm1410, 1, 0
      %v1427 = vsel %vm1411, 1, 0
      %v1428 = vsel %vm1412, 1, 0
      %v1429 = vsel %vm1413, 1, 0
      %v1430 = vsel %vm1414, 1, 0
      %v1431 = vsel %vm1415, 1, 0
      %v1432 = vsel %vm1416, 1, 0
      %v1433 = vsel %vm1417, 1, 0
      %v1434 = vsel %vm1418, 1, 0
      %v1435 = vsel %vm1419, 1, 0
      %v1436 = vsel %vm1420, 1, 0
      %v1437 = vsel %vm1421, 1, 0
      %v1438 = vsel %vm1422, 1, 0
      %v1439 = vsel %vm1423, 1, 0
      %v1440 = vsel %vm1424, 1, 0
      %vm1441 = vcmp.eq.s32.totalorder %v1425, 1
      %vm1442 = vcmp.eq.s32.totalorder %v1426, 1
      %vm1443 = vcmp.eq.s32.totalorder %v1427, 1
      %vm1444 = vcmp.eq.s32.totalorder %v1428, 1
      %vm1445 = vcmp.eq.s32.totalorder %v1429, 1
      %vm1446 = vcmp.eq.s32.totalorder %v1430, 1
      %vm1447 = vcmp.eq.s32.totalorder %v1431, 1
      %vm1448 = vcmp.eq.s32.totalorder %v1432, 1
      %vm1449 = vcmp.eq.s32.totalorder %v1433, 1
      %vm1450 = vcmp.eq.s32.totalorder %v1434, 1
      %vm1451 = vcmp.eq.s32.totalorder %v1435, 1
      %vm1452 = vcmp.eq.s32.totalorder %v1436, 1
      %vm1453 = vcmp.eq.s32.totalorder %v1437, 1
      %vm1454 = vcmp.eq.s32.totalorder %v1438, 1
      %vm1455 = vcmp.eq.s32.totalorder %v1439, 1
      %vm1456 = vcmp.eq.s32.totalorder %v1440, 1
      %v1457 = vsel %vm1441, %v1159, -inf
      %v1458 = vsel %vm1442, %v1162, -inf
      %v1459 = vsel %vm1443, %v1167, -inf
      %v1460 = vsel %vm1444, %v1170, -inf
      %v1461 = vsel %vm1445, %v1175, -inf
      %v1462 = vsel %vm1446, %v1178, -inf
      %v1463 = vsel %vm1447, %v1183, -inf
      %v1464 = vsel %vm1448, %v1186, -inf
      %v1465 = vsel %vm1449, %v1191, -inf
      %v1466 = vsel %vm1450, %v1194, -inf
      %v1467 = vsel %vm1451, %v1199, -inf
      %v1468 = vsel %vm1452, %v1202, -inf
      %v1469 = vsel %vm1453, %v1207, -inf
      %v1470 = vsel %vm1454, %v1210, -inf
      %v1471 = vsel %vm1455, %v1215, -inf
      %v1472 = vsel %vm1456, %v1218, -inf
      %v1473 = vsel %vm1441, %v1328, -inf
      %v1474 = vsel %vm1442, %v1331, -inf
      %v1475 = vsel %vm1443, %v1336, -inf
      %v1476 = vsel %vm1444, %v1339, -inf
      %v1477 = vsel %vm1445, %v1344, -inf
      %v1478 = vsel %vm1446, %v1347, -inf
      %v1479 = vsel %vm1447, %v1352, -inf
      %v1480 = vsel %vm1448, %v1355, -inf
      %v1481 = vsel %vm1449, %v1360, -inf
      %v1482 = vsel %vm1450, %v1363, -inf
      %v1483 = vsel %vm1451, %v1368, -inf
      %v1484 = vsel %vm1452, %v1371, -inf
      %v1485 = vsel %vm1453, %v1376, -inf
      %v1486 = vsel %vm1454, %v1379, -inf
      %v1487 = vsel %vm1455, %v1384, -inf
      %v1488 = vsel %vm1456, %v1387, -inf
      %1489 = vmax.xlane.f32.xlu0 %v1457
      %v1490 = vpop.xlane.xlu0 %1489
      %1491 = vmax.xlane.f32.xlu0 %v1458
      %v1492 = vpop.xlane.xlu0 %1491
      %1493 = vmax.xlane.f32.xlu0 %v1459
      %v1494 = vpop.xlane.xlu0 %1493
      %1495 = vmax.xlane.f32.xlu0 %v1460
      %v1496 = vpop.xlane.xlu0 %1495
      %1497 = vmax.xlane.f32.xlu0 %v1461
      %v1498 = vpop.xlane.xlu0 %1497
      %1499 = vmax.xlane.f32.xlu0 %v1462
      %v1500 = vpop.xlane.xlu0 %1499
      %1501 = vmax.xlane.f32.xlu0 %v1463
      %v1502 = vpop.xlane.xlu0 %1501
      %1503 = vmax.xlane.f32.xlu0 %v1464
      %v1504 = vpop.xlane.xlu0 %1503
      %1505 = vmax.xlane.f32.xlu0 %v1465
      %v1506 = vpop.xlane.xlu0 %1505
      %1507 = vmax.xlane.f32.xlu0 %v1466
      %v1508 = vpop.xlane.xlu0 %1507
      %1509 = vmax.xlane.f32.xlu0 %v1467
      %v1510 = vpop.xlane.xlu0 %1509
      %1511 = vmax.xlane.f32.xlu0 %v1468
      %v1512 = vpop.xlane.xlu0 %1511
      %1513 = vmax.xlane.f32.xlu0 %v1469
      %v1514 = vpop.xlane.xlu0 %1513
      %1515 = vmax.xlane.f32.xlu0 %v1470
      %v1516 = vpop.xlane.xlu0 %1515
      %1517 = vmax.xlane.f32.xlu0 %v1471
      %v1518 = vpop.xlane.xlu0 %1517
      %1519 = vmax.xlane.f32.xlu0 %v1472
      %v1520 = vpop.xlane.xlu0 %1519
      %1521 = vmax.xlane.f32.xlu0 %v1473
      %v1522 = vpop.xlane.xlu0 %1521
      %1523 = vmax.xlane.f32.xlu0 %v1474
      %v1524 = vpop.xlane.xlu0 %1523
      %1525 = vmax.xlane.f32.xlu0 %v1475
      %v1526 = vpop.xlane.xlu0 %1525
      %1527 = vmax.xlane.f32.xlu0 %v1476
      %v1528 = vpop.xlane.xlu0 %1527
      %1529 = vmax.xlane.f32.xlu0 %v1477
      %v1530 = vpop.xlane.xlu0 %1529
      %1531 = vmax.xlane.f32.xlu0 %v1478
      %v1532 = vpop.xlane.xlu0 %1531
      %1533 = vmax.xlane.f32.xlu0 %v1479
      %v1534 = vpop.xlane.xlu0 %1533
      %1535 = vmax.xlane.f32.xlu0 %v1480
      %v1536 = vpop.xlane.xlu0 %1535
      %1537 = vmax.xlane.f32.xlu0 %v1481
      %v1538 = vpop.xlane.xlu0 %1537
      %1539 = vmax.xlane.f32.xlu0 %v1482
      %v1540 = vpop.xlane.xlu0 %1539
      %1541 = vmax.xlane.f32.xlu0 %v1483
      %v1542 = vpop.xlane.xlu0 %1541
      %1543 = vmax.xlane.f32.xlu0 %v1484
      %v1544 = vpop.xlane.xlu0 %1543
      %1545 = vmax.xlane.f32.xlu0 %v1485
      %v1546 = vpop.xlane.xlu0 %1545
      %1547 = vmax.xlane.f32.xlu0 %v1486
      %v1548 = vpop.xlane.xlu0 %1547
      %1549 = vmax.xlane.f32.xlu0 %v1487
      %v1550 = vpop.xlane.xlu0 %1549
      %1551 = vmax.xlane.f32.xlu0 %v1488
      %v1552 = vpop.xlane.xlu0 %1551
      %v1553 = vsub.f32 %v1457, %v1490
      %v1554 = vsub.f32 %v1458, %v1492
      %v1555 = vsub.f32 %v1459, %v1494
      %v1556 = vsub.f32 %v1460, %v1496
      %v1557 = vsub.f32 %v1461, %v1498
      %v1558 = vsub.f32 %v1462, %v1500
      %v1559 = vsub.f32 %v1463, %v1502
      %v1560 = vsub.f32 %v1464, %v1504
      %v1561 = vsub.f32 %v1465, %v1506
      %v1562 = vsub.f32 %v1466, %v1508
      %v1563 = vsub.f32 %v1467, %v1510
      %v1564 = vsub.f32 %v1468, %v1512
      %v1565 = vsub.f32 %v1469, %v1514
      %v1566 = vsub.f32 %v1470, %v1516
      %v1567 = vsub.f32 %v1471, %v1518
      %v1568 = vsub.f32 %v1472, %v1520
      %v1569 = vsub.f32 %v1473, %v1522
      %v1570 = vsub.f32 %v1474, %v1524
      %v1571 = vsub.f32 %v1475, %v1526
      %v1572 = vsub.f32 %v1476, %v1528
      %v1573 = vsub.f32 %v1477, %v1530
      %v1574 = vsub.f32 %v1478, %v1532
      %v1575 = vsub.f32 %v1479, %v1534
      %v1576 = vsub.f32 %v1480, %v1536
      %v1577 = vsub.f32 %v1481, %v1538
      %v1578 = vsub.f32 %v1482, %v1540
      %v1579 = vsub.f32 %v1483, %v1542
      %v1580 = vsub.f32 %v1484, %v1544
      %v1581 = vsub.f32 %v1485, %v1546
      %v1582 = vsub.f32 %v1486, %v1548
      %v1583 = vsub.f32 %v1487, %v1550
      %v1584 = vsub.f32 %v1488, %v1552
      %v1585 = vmul.f32 %v1553, 1.442695
      %v1586 = vpow.pop %v1585
      %v1587 = vmul.f32 %v1554, 1.442695
      %v1588 = vpow.pop %v1587
      %v1589 = vmul.f32 %v1555, 1.442695
      %v1590 = vpow.pop %v1589
      %v1591 = vmul.f32 %v1556, 1.442695
      %v1592 = vpow.pop %v1591
      %v1593 = vmul.f32 %v1557, 1.442695
      %v1594 = vpow.pop %v1593
      %v1595 = vmul.f32 %v1558, 1.442695
      %v1596 = vpow.pop %v1595
      %v1597 = vmul.f32 %v1559, 1.442695
      %v1598 = vpow.pop %v1597
      %v1599 = vmul.f32 %v1560, 1.442695
      %v1600 = vpow.pop %v1599
      %v1601 = vmul.f32 %v1561, 1.442695
      %v1602 = vpow.pop %v1601
      %v1603 = vmul.f32 %v1562, 1.442695
      %v1604 = vpow.pop %v1603
      %v1605 = vmul.f32 %v1563, 1.442695
      %v1606 = vpow.pop %v1605
      %v1607 = vmul.f32 %v1564, 1.442695
      %v1608 = vpow.pop %v1607
      %v1609 = vmul.f32 %v1565, 1.442695
      %v1610 = vpow.pop %v1609
      %v1611 = vmul.f32 %v1566, 1.442695
      %v1612 = vpow.pop %v1611
      %v1613 = vmul.f32 %v1567, 1.442695
      %v1614 = vpow.pop %v1613
      %v1615 = vmul.f32 %v1568, 1.442695
      %v1616 = vpow.pop %v1615
      %v1617 = vmul.f32 %v1569, 1.442695
      %v1618 = vpow.pop %v1617
      %v1619 = vmul.f32 %v1570, 1.442695
      %v1620 = vpow.pop %v1619
      %v1621 = vmul.f32 %v1571, 1.442695
      %v1622 = vpow.pop %v1621
      %v1623 = vmul.f32 %v1572, 1.442695
      %v1624 = vpow.pop %v1623
      %v1625 = vmul.f32 %v1573, 1.442695
      %v1626 = vpow.pop %v1625
      %v1627 = vmul.f32 %v1574, 1.442695
      %v1628 = vpow.pop %v1627
      %v1629 = vmul.f32 %v1575, 1.442695
      %v1630 = vpow.pop %v1629
      %v1631 = vmul.f32 %v1576, 1.442695
      %v1632 = vpow.pop %v1631
      %v1633 = vmul.f32 %v1577, 1.442695
      %v1634 = vpow.pop %v1633
      %v1635 = vmul.f32 %v1578, 1.442695
      %v1636 = vpow.pop %v1635
      %v1637 = vmul.f32 %v1579, 1.442695
      %v1638 = vpow.pop %v1637
      %v1639 = vmul.f32 %v1580, 1.442695
      %v1640 = vpow.pop %v1639
      %v1641 = vmul.f32 %v1581, 1.442695
      %v1642 = vpow.pop %v1641
      %v1643 = vmul.f32 %v1582, 1.442695
      %v1644 = vpow.pop %v1643
      %v1645 = vmul.f32 %v1583, 1.442695
      %v1646 = vpow.pop %v1645
      %v1647 = vmul.f32 %v1584, 1.442695
      %v1648 = vpow.pop %v1647
      %1649 = vadd.xlane.f32.xlu0 %v1586
      %v1650 = vpop.xlane.xlu0 %1649
      %1651 = vadd.xlane.f32.xlu0 %v1588
      %v1652 = vpop.xlane.xlu0 %1651
      %1653 = vadd.xlane.f32.xlu0 %v1590
      %v1654 = vpop.xlane.xlu0 %1653
      %1655 = vadd.xlane.f32.xlu0 %v1592
      %v1656 = vpop.xlane.xlu0 %1655
      %1657 = vadd.xlane.f32.xlu0 %v1594
      %v1658 = vpop.xlane.xlu0 %1657
      %1659 = vadd.xlane.f32.xlu0 %v1596
      %v1660 = vpop.xlane.xlu0 %1659
      %1661 = vadd.xlane.f32.xlu0 %v1598
      %v1662 = vpop.xlane.xlu0 %1661
      %1663 = vadd.xlane.f32.xlu0 %v1600
      %v1664 = vpop.xlane.xlu0 %1663
      %1665 = vadd.xlane.f32.xlu0 %v1602
      %v1666 = vpop.xlane.xlu0 %1665
      %1667 = vadd.xlane.f32.xlu0 %v1604
      %v1668 = vpop.xlane.xlu0 %1667
      %1669 = vadd.xlane.f32.xlu0 %v1606
      %v1670 = vpop.xlane.xlu0 %1669
      %1671 = vadd.xlane.f32.xlu0 %v1608
      %v1672 = vpop.xlane.xlu0 %1671
      %1673 = vadd.xlane.f32.xlu0 %v1610
      %v1674 = vpop.xlane.xlu0 %1673
      %1675 = vadd.xlane.f32.xlu0 %v1612
      %v1676 = vpop.xlane.xlu0 %1675
      %1677 = vadd.xlane.f32.xlu0 %v1614
      %v1678 = vpop.xlane.xlu0 %1677
      %1679 = vadd.xlane.f32.xlu0 %v1616
      %v1680 = vpop.xlane.xlu0 %1679
      %1681 = vadd.xlane.f32.xlu0 %v1618
      %v1682 = vpop.xlane.xlu0 %1681
      %1683 = vadd.xlane.f32.xlu0 %v1620
      %v1684 = vpop.xlane.xlu0 %1683
      %1685 = vadd.xlane.f32.xlu0 %v1622
      %v1686 = vpop.xlane.xlu0 %1685
      %1687 = vadd.xlane.f32.xlu0 %v1624
      %v1688 = vpop.xlane.xlu0 %1687
      %1689 = vadd.xlane.f32.xlu0 %v1626
      %v1690 = vpop.xlane.xlu0 %1689
      %1691 = vadd.xlane.f32.xlu0 %v1628
      %v1692 = vpop.xlane.xlu0 %1691
      %1693 = vadd.xlane.f32.xlu0 %v1630
      %v1694 = vpop.xlane.xlu0 %1693
      %1695 = vadd.xlane.f32.xlu0 %v1632
      %v1696 = vpop.xlane.xlu0 %1695
      %1697 = vadd.xlane.f32.xlu0 %v1634
      %v1698 = vpop.xlane.xlu0 %1697
      %1699 = vadd.xlane.f32.xlu0 %v1636
      %v1700 = vpop.xlane.xlu0 %1699
      %1701 = vadd.xlane.f32.xlu0 %v1638
      %v1702 = vpop.xlane.xlu0 %1701
      %1703 = vadd.xlane.f32.xlu0 %v1640
      %v1704 = vpop.xlane.xlu0 %1703
      %1705 = vadd.xlane.f32.xlu0 %v1642
      %v1706 = vpop.xlane.xlu0 %1705
      %1707 = vadd.xlane.f32.xlu0 %v1644
      %v1708 = vpop.xlane.xlu0 %1707
      %1709 = vadd.xlane.f32.xlu0 %v1646
      %v1710 = vpop.xlane.xlu0 %1709
      %1711 = vadd.xlane.f32.xlu0 %v1648
      %v1712 = vpop.xlane.xlu0 %1711
      %v1713 = vrcp.pop %v1650
      %v1714 = vrcp.pop %v1652
      %v1715 = vrcp.pop %v1654
      %v1716 = vrcp.pop %v1656
      %v1717 = vrcp.pop %v1658
      %v1718 = vrcp.pop %v1660
      %v1719 = vrcp.pop %v1662
      %v1720 = vrcp.pop %v1664
      %v1721 = vrcp.pop %v1666
      %v1722 = vrcp.pop %v1668
      %v1723 = vrcp.pop %v1670
      %v1724 = vrcp.pop %v1672
      %v1725 = vrcp.pop %v1674
      %v1726 = vrcp.pop %v1676
      %v1727 = vrcp.pop %v1678
      %v1728 = vrcp.pop %v1680
      %v1729 = vrcp.pop %v1682
      %v1730 = vrcp.pop %v1684
      %v1731 = vrcp.pop %v1686
      %v1732 = vrcp.pop %v1688
      %v1733 = vrcp.pop %v1690
      %v1734 = vrcp.pop %v1692
      %v1735 = vrcp.pop %v1694
      %v1736 = vrcp.pop %v1696
      %v1737 = vrcp.pop %v1698
      %v1738 = vrcp.pop %v1700
      %v1739 = vrcp.pop %v1702
      %v1740 = vrcp.pop %v1704
      %v1741 = vrcp.pop %v1706
      %v1742 = vrcp.pop %v1708
      %v1743 = vrcp.pop %v1710
      %v1744 = vrcp.pop %v1712
      %v1745 = vmul.f32 %v1586, %v1713
      %v1746 = vmul.f32 %v1588, %v1714
      %v1747 = vmul.f32 %v1590, %v1715
      %v1748 = vmul.f32 %v1592, %v1716
      %v1749 = vmul.f32 %v1594, %v1717
      %v1750 = vmul.f32 %v1596, %v1718
      %v1751 = vmul.f32 %v1598, %v1719
      %v1752 = vmul.f32 %v1600, %v1720
      %v1753 = vmul.f32 %v1602, %v1721
      %v1754 = vmul.f32 %v1604, %v1722
      %v1755 = vmul.f32 %v1606, %v1723
      %v1756 = vmul.f32 %v1608, %v1724
      %v1757 = vmul.f32 %v1610, %v1725
      %v1758 = vmul.f32 %v1612, %v1726
      %v1759 = vmul.f32 %v1614, %v1727
      %v1760 = vmul.f32 %v1616, %v1728
      %v1761 = vmul.f32 %v1618, %v1729
      %v1762 = vmul.f32 %v1620, %v1730
      %v1763 = vmul.f32 %v1622, %v1731
      %v1764 = vmul.f32 %v1624, %v1732
      %v1765 = vmul.f32 %v1626, %v1733
      %v1766 = vmul.f32 %v1628, %v1734
      %v1767 = vmul.f32 %v1630, %v1735
      %v1768 = vmul.f32 %v1632, %v1736
      %v1769 = vmul.f32 %v1634, %v1737
      %v1770 = vmul.f32 %v1636, %v1738
      %v1771 = vmul.f32 %v1638, %v1739
      %v1772 = vmul.f32 %v1640, %v1740
      %v1773 = vmul.f32 %v1642, %v1741
      %v1774 = vmul.f32 %v1644, %v1742
      %v1775 = vmul.f32 %v1646, %v1743
      %v1776 = vmul.f32 %v1648, %v1744
      %v1777 = vpack.c.bf16 %v1746, %v1745
      %v1778 = vpack.c.bf16 %v1748, %v1747
      %v1779 = vpack.c.bf16 %v1750, %v1749
      %v1780 = vpack.c.bf16 %v1752, %v1751
      %v1781 = vpack.c.bf16 %v1754, %v1753
      %v1782 = vpack.c.bf16 %v1756, %v1755
      %v1783 = vpack.c.bf16 %v1758, %v1757
      %v1784 = vpack.c.bf16 %v1760, %v1759
      %v1785 = vpack.c.bf16 %v1762, %v1761
      %v1786 = vpack.c.bf16 %v1764, %v1763
      %v1787 = vpack.c.bf16 %v1766, %v1765
      %v1788 = vpack.c.bf16 %v1768, %v1767
      %v1789 = vpack.c.bf16 %v1770, %v1769
      %v1790 = vpack.c.bf16 %v1772, %v1771
      %v1791 = vpack.c.bf16 %v1774, %v1773
      %v1792 = vpack.c.bf16 %v1776, %v1775
      %1793 = vmatprep.subr.bf16.mxu0 0
      %1794 = vmatpush1.bf16.msra.mxu0 %v1035
      %1795 = vmatprep.subr.bf16.mxu0 0
      %1796 = vmatpush1.bf16.msra.mxu0 %v1036
      %1797 = vmatprep.subr.bf16.mxu0 0
      %1798 = vmatpush1.bf16.msra.mxu0 %v1037
      %1799 = vmatprep.subr.bf16.mxu0 0
      %1800 = vmatpush1.bf16.msra.mxu0 %v1038
      %1801 = vmatprep.subr.bf16.mxu0 0
      %1802 = vmatpush1.bf16.msra.mxu0 %v1039
      %1803 = vmatprep.subr.bf16.mxu0 0
      %1804 = vmatpush1.bf16.msra.mxu0 %v1040
      %1805 = vmatprep.subr.bf16.mxu0 0
      %1806 = vmatpush1.bf16.msra.mxu0 %v1041
      %1807 = vmatprep.subr.bf16.mxu0 0
      %1808 = vmatpush1.bf16.msra.mxu0 %v1042
      %1809 = vmatprep.subr.bf16.mxu0 0
      %1810 = vmatpush1.bf16.msra.mxu0 0
      %1811 = vmatprep.subr.bf16.mxu0 0
      %1812 = vmatpush1.bf16.msra.mxu0 0
      %1813 = vmatprep.subr.bf16.mxu0 0
      %1814 = vmatpush1.bf16.msra.mxu0 0
      %1815 = vmatprep.subr.bf16.mxu0 0
      %1816 = vmatpush1.bf16.msra.mxu0 0
      %1817 = vmatprep.subr.bf16.mxu0 0
      %1818 = vmatpush1.bf16.msra.mxu0 0
      %1819 = vmatprep.subr.bf16.mxu0 0
      %1820 = vmatpush1.bf16.msra.mxu0 0
      %1821 = vmatprep.subr.bf16.mxu0 0
      %1822 = vmatpush1.bf16.msra.mxu0 0
      %1823 = vmatprep.subr.bf16.mxu0 0
      %1824 = vmatpush1.bf16.msra.mxu0 0
      %1825 = vmatprep.mubr.bf16.mxu0 0
      %1826 = vmatmul.mubr.bf16.gmra.mrb[0].mxu0 %v1777
      %v1827 = vpop.f32.mrb[0].mxu0
      %v1828 = vadd.f32 0.0, %v1827
      %v1829 = vpop.f32.mrb[0].mxu0
      %v1830 = vpop.f32.mrb[0].mxu0
      %v1831 = vadd.f32 0.0, %v1830
      %v1832 = vpop.f32.mrb[0].mxu0
      %1833 = vmatprep.mubr.bf16.mxu0 0
      %1834 = vmatmul.mubr.bf16.gmra.mrb[0].mxu0 %v1778
      %v1835 = vpop.f32.mrb[0].mxu0
      %v1836 = vadd.f32 0.0, %v1835
      %v1837 = vpop.f32.mrb[0].mxu0
      %v1838 = vpop.f32.mrb[0].mxu0
      %v1839 = vadd.f32 0.0, %v1838
      %v1840 = vpop.f32.mrb[0].mxu0
      %1841 = vmatprep.mubr.bf16.mxu0 0
      %1842 = vmatmul.mubr.bf16.gmra.mrb[0].mxu0 %v1779
      %v1843 = vpop.f32.mrb[0].mxu0
      %v1844 = vadd.f32 0.0, %v1843
      %v1845 = vpop.f32.mrb[0].mxu0
      %v1846 = vpop.f32.mrb[0].mxu0
      %v1847 = vadd.f32 0.0, %v1846
      %v1848 = vpop.f32.mrb[0].mxu0
      %1849 = vmatprep.mubr.bf16.mxu0 0
      %1850 = vmatmul.mubr.bf16.gmra.mrb[0].mxu0 %v1780
      %v1851 = vpop.f32.mrb[0].mxu0
      %v1852 = vadd.f32 0.0, %v1851
      %v1853 = vpop.f32.mrb[0].mxu0
      %v1854 = vpop.f32.mrb[0].mxu0
      %v1855 = vadd.f32 0.0, %v1854
      %v1856 = vpop.f32.mrb[0].mxu0
      %1857 = vmatprep.mubr.bf16.mxu0 0
      %1858 = vmatmul.mubr.bf16.gmra.mrb[0].mxu0 %v1781
      %v1859 = vpop.f32.mrb[0].mxu0
      %v1860 = vadd.f32 0.0, %v1859
      %v1861 = vpop.f32.mrb[0].mxu0
      %v1862 = vpop.f32.mrb[0].mxu0
      %v1863 = vadd.f32 0.0, %v1862
      %v1864 = vpop.f32.mrb[0].mxu0
      %1865 = vmatprep.mubr.bf16.mxu0 0
      %1866 = vmatmul.mubr.bf16.gmra.mrb[0].mxu0 %v1782
      %v1867 = vpop.f32.mrb[0].mxu0
      %v1868 = vadd.f32 0.0, %v1867
      %v1869 = vpop.f32.mrb[0].mxu0
      %v1870 = vpop.f32.mrb[0].mxu0
      %v1871 = vadd.f32 0.0, %v1870
      %v1872 = vpop.f32.mrb[0].mxu0
      %1873 = vmatprep.mubr.bf16.mxu0 0
      %1874 = vmatmul.mubr.bf16.gmra.mrb[0].mxu0 %v1783
      %v1875 = vpop.f32.mrb[0].mxu0
      %v1876 = vadd.f32 0.0, %v1875
      %v1877 = vpop.f32.mrb[0].mxu0
      %v1878 = vpop.f32.mrb[0].mxu0
      %v1879 = vadd.f32 0.0, %v1878
      %v1880 = vpop.f32.mrb[0].mxu0
      %1881 = vmatprep.mubr.bf16.mxu0 0
      %1882 = vmatmul.mubr.bf16.gmra.mrb[0].mxu0 %v1784
      %v1883 = vpop.f32.mrb[0].mxu0
      %v1884 = vadd.f32 0.0, %v1883
      %v1885 = vpop.f32.mrb[0].mxu0
      %v1886 = vpop.f32.mrb[0].mxu0
      %v1887 = vadd.f32 0.0, %v1886
      %v1888 = vpop.f32.mrb[0].mxu0
      %1889 = vdwg.mxu0
      %1890 = vmatprep.subr.bf16.mxu0 0
      %1891 = vmatpush1.bf16.msra.mxu0 %v1043
      %1892 = vmatprep.subr.bf16.mxu0 0
      %1893 = vmatpush1.bf16.msra.mxu0 %v1044
      %1894 = vmatprep.subr.bf16.mxu0 0
      %1895 = vmatpush1.bf16.msra.mxu0 %v1045
      %1896 = vmatprep.subr.bf16.mxu0 0
      %1897 = vmatpush1.bf16.msra.mxu0 %v1046
      %1898 = vmatprep.subr.bf16.mxu0 0
      %1899 = vmatpush1.bf16.msra.mxu0 %v1047
      %1900 = vmatprep.subr.bf16.mxu0 0
      %1901 = vmatpush1.bf16.msra.mxu0 %v1048
      %1902 = vmatprep.subr.bf16.mxu0 0
      %1903 = vmatpush1.bf16.msra.mxu0 %v1049
      %1904 = vmatprep.subr.bf16.mxu0 0
      %1905 = vmatpush1.bf16.msra.mxu0 %v1050
      %1906 = vmatprep.subr.bf16.mxu0 0
      %1907 = vmatpush1.bf16.msra.mxu0 0
      %1908 = vmatprep.subr.bf16.mxu0 0
      %1909 = vmatpush1.bf16.msra.mxu0 0
      %1910 = vmatprep.subr.bf16.mxu0 0
      %1911 = vmatpush1.bf16.msra.mxu0 0
      %1912 = vmatprep.subr.bf16.mxu0 0
      %1913 = vmatpush1.bf16.msra.mxu0 0
      %1914 = vmatprep.subr.bf16.mxu0 0
      %1915 = vmatpush1.bf16.msra.mxu0 0
      %1916 = vmatprep.subr.bf16.mxu0 0
      %1917 = vmatpush1.bf16.msra.mxu0 0
      %1918 = vmatprep.subr.bf16.mxu0 0
      %1919 = vmatpush1.bf16.msra.mxu0 0
      %1920 = vmatprep.subr.bf16.mxu0 0
      %1921 = vmatpush1.bf16.msra.mxu0 0
      %1922 = vmatprep.mubr.bf16.mxu0 0
      %1923 = vmatmul.mubr.bf16.gmra.mrb[0].mxu0 %v1785
      %v1924 = vpop.f32.mrb[0].mxu0
      %v1925 = vadd.f32 0.0, %v1924
      %v1926 = vpop.f32.mrb[0].mxu0
      %v1927 = vpop.f32.mrb[0].mxu0
      %v1928 = vadd.f32 0.0, %v1927
      %v1929 = vpop.f32.mrb[0].mxu0
      %1930 = vmatprep.mubr.bf16.mxu0 0
      %1931 = vmatmul.mubr.bf16.gmra.mrb[0].mxu0 %v1786
      %v1932 = vpop.f32.mrb[0].mxu0
      %v1933 = vadd.f32 0.0, %v1932
      %v1934 = vpop.f32.mrb[0].mxu0
      %v1935 = vpop.f32.mrb[0].mxu0
      %v1936 = vadd.f32 0.0, %v1935
      %v1937 = vpop.f32.mrb[0].mxu0
      %1938 = vmatprep.mubr.bf16.mxu0 0
      %1939 = vmatmul.mubr.bf16.gmra.mrb[0].mxu0 %v1787
      %v1940 = vpop.f32.mrb[0].mxu0
      %v1941 = vadd.f32 0.0, %v1940
      %v1942 = vpop.f32.mrb[0].mxu0
      %v1943 = vpop.f32.mrb[0].mxu0
      %v1944 = vadd.f32 0.0, %v1943
      %v1945 = vpop.f32.mrb[0].mxu0
      %1946 = vmatprep.mubr.bf16.mxu0 0
      %1947 = vmatmul.mubr.bf16.gmra.mrb[0].mxu0 %v1788
      %v1948 = vpop.f32.mrb[0].mxu0
      %v1949 = vadd.f32 0.0, %v1948
      %v1950 = vpop.f32.mrb[0].mxu0
      %v1951 = vpop.f32.mrb[0].mxu0
      %v1952 = vadd.f32 0.0, %v1951
      %v1953 = vpop.f32.mrb[0].mxu0
      %1954 = vmatprep.mubr.bf16.mxu0 0
      %1955 = vmatmul.mubr.bf16.gmra.mrb[0].mxu0 %v1789
      %v1956 = vpop.f32.mrb[0].mxu0
      %v1957 = vadd.f32 0.0, %v1956
      %v1958 = vpop.f32.mrb[0].mxu0
      %v1959 = vpop.f32.mrb[0].mxu0
      %v1960 = vadd.f32 0.0, %v1959
      %v1961 = vpop.f32.mrb[0].mxu0
      %1962 = vmatprep.mubr.bf16.mxu0 0
      %1963 = vmatmul.mubr.bf16.gmra.mrb[0].mxu0 %v1790
      %v1964 = vpop.f32.mrb[0].mxu0
      %v1965 = vadd.f32 0.0, %v1964
      %v1966 = vpop.f32.mrb[0].mxu0
      %v1967 = vpop.f32.mrb[0].mxu0
      %v1968 = vadd.f32 0.0, %v1967
      %v1969 = vpop.f32.mrb[0].mxu0
      %1970 = vmatprep.mubr.bf16.mxu0 0
      %1971 = vmatmul.mubr.bf16.gmra.mrb[0].mxu0 %v1791
      %v1972 = vpop.f32.mrb[0].mxu0
      %v1973 = vadd.f32 0.0, %v1972
      %v1974 = vpop.f32.mrb[0].mxu0
      %v1975 = vpop.f32.mrb[0].mxu0
      %v1976 = vadd.f32 0.0, %v1975
      %v1977 = vpop.f32.mrb[0].mxu0
      %1978 = vmatprep.mubr.bf16.mxu0 0
      %1979 = vmatmul.mubr.bf16.gmra.mrb[0].mxu0 %v1792
      %v1980 = vpop.f32.mrb[0].mxu0
      %v1981 = vadd.f32 0.0, %v1980
      %v1982 = vpop.f32.mrb[0].mxu0
      %v1983 = vpop.f32.mrb[0].mxu0
      %v1984 = vadd.f32 0.0, %v1983
      %v1985 = vpop.f32.mrb[0].mxu0
      %1986 = vdwg.mxu0
      %1987 = vst.msk [vmem:[%s150] sm:$0xff] %vm1075, %v1828
      %1988 = vst.msk [vmem:[%s150 + $0x8] sm:$0xff] %vm1075, %v1831
      %1989 = vst.msk [vmem:[%s150 + $0x10] sm:$0xff] %vm1075, %v1836
      %1990 = vst.msk [vmem:[%s150 + $0x18] sm:$0xff] %vm1075, %v1839
      %1991 = vst.msk [vmem:[%s150 + $0x20] sm:$0xff] %vm1075, %v1844
      %1992 = vst.msk [vmem:[%s150 + $0x28] sm:$0xff] %vm1075, %v1847
      %1993 = vst.msk [vmem:[%s150 + $0x30] sm:$0xff] %vm1075, %v1852
      %1994 = vst.msk [vmem:[%s150 + $0x38] sm:$0xff] %vm1075, %v1855
      %1995 = vst.msk [vmem:[%s150 + $0x40] sm:$0xff] %vm1075, %v1860
      %1996 = vst.msk [vmem:[%s150 + $0x48] sm:$0xff] %vm1075, %v1863
      %1997 = vst.msk [vmem:[%s150 + $0x50] sm:$0xff] %vm1075, %v1868
      %1998 = vst.msk [vmem:[%s150 + $0x58] sm:$0xff] %vm1075, %v1871
      %1999 = vst.msk [vmem:[%s150 + $0x60] sm:$0xff] %vm1075, %v1876
      %2000 = vst.msk [vmem:[%s150 + $0x68] sm:$0xff] %vm1075, %v1879
      %2001 = vst.msk [vmem:[%s150 + $0x70] sm:$0xff] %vm1075, %v1884
      %2002 = vst.msk [vmem:[%s150 + $0x78] sm:$0xff] %vm1075, %v1887
      %2003 = vst.msk [vmem:[%s150 + $0x80] sm:$0xff] %vm1075, %v1925
      %2004 = vst.msk [vmem:[%s150 + $0x88] sm:$0xff] %vm1075, %v1928
      %2005 = vst.msk [vmem:[%s150 + $0x90] sm:$0xff] %vm1075, %v1933
      %2006 = vst.msk [vmem:[%s150 + $0x98] sm:$0xff] %vm1075, %v1936
      %2007 = vst.msk [vmem:[%s150 + $0xa0] sm:$0xff] %vm1075, %v1941
      %2008 = vst.msk [vmem:[%s150 + $0xa8] sm:$0xff] %vm1075, %v1944
      %2009 = vst.msk [vmem:[%s150 + $0xb0] sm:$0xff] %vm1075, %v1949
      %2010 = vst.msk [vmem:[%s150 + $0xb8] sm:$0xff] %vm1075, %v1952
      %2011 = vst.msk [vmem:[%s150 + $0xc0] sm:$0xff] %vm1075, %v1957
      %2012 = vst.msk [vmem:[%s150 + $0xc8] sm:$0xff] %vm1075, %v1960
      %2013 = vst.msk [vmem:[%s150 + $0xd0] sm:$0xff] %vm1075, %v1965
      %2014 = vst.msk [vmem:[%s150 + $0xd8] sm:$0xff] %vm1075, %v1968
      %2015 = vst.msk [vmem:[%s150 + $0xe0] sm:$0xff] %vm1075, %v1973
      %2016 = vst.msk [vmem:[%s150 + $0xe8] sm:$0xff] %vm1075, %v1976
      %2017 = vst.msk [vmem:[%s150 + $0xf0] sm:$0xff] %vm1075, %v1981
      %2018 = vst.msk [vmem:[%s150 + $0xf8] sm:$0xff] %vm1075, %v1984
      %s2019 = smul.u32 2, %s13
      %p2020 = scmp.lt.s32.totalorder %s2019, 3
      %s2021 = scalar_select %p2020, %s2019, 3
      %s2022 = smul.addr %s2021, 16
      %s2023 = smul.addr %s2022, 8
      %s2024 = scalar_lea.vmem %s2, %s2023
      // Predicated region
      $region29: #{head_forward.1} parent=27 // pred_check
        %p2025 = pneg %p78
      $region30: #{head_forward.1} parent=27 // pred_check_branch
        %2027 = sbr.rel (%p2025) target = $region32
      $region31: #{head_forward.1} parent=27 // pred_region
        %s2028 = smul.u32 2, %s13
      $region32: #{head_forward.1} parent=27 // pred_fallthru
        _
    $region28: #{head_forward.1} parent=5 // pred_fallthru
      _
    %p2029 = scmp.le.s32.totalorder 2, %s8
    // Predicated region
    $region33: #{head_forward.1} parent=5 // pred_check
      %p2030 = pneg %p2029
    $region34: #{head_forward.1} parent=5 // pred_check_branch
      %2032 = sbr.rel (%p2030) target = $region36
    $region35: #{head_forward.1} parent=5 // pred_region
      %s2033 = ssub.s32 %s8, 2
      // Predicated region
      $region37: #{head_forward.1} parent=35 // pred_check
        %p2034 = pneg %p84
      $region38: #{head_forward.1} parent=35 // pred_check_branch
        %2036 = sbr.rel (%p2034) target = $region40
      $region39: #{head_forward.1} parent=35 // pred_region
        %s2037 = smul.u32 2, %s14
        %p2038 = scmp.lt.s32.totalorder %s2037, 3
        %s2039 = scalar_select %p2038, %s2037, 3
        %s2040 = smul.addr %s2039, 16
        %s2041 = smul.addr %s2040, 8
        %s2042 = scalar_lea.vmem %s2, %s2041
      $region40: #{head_forward.1} parent=35 // pred_fallthru
        _
    $region36: #{head_forward.1} parent=5 // pred_fallthru
      _
  $region6: #{head_forward.1} parent=0 // loop_footer
    %s12 = sadd.s32 1, %s8
  $region7: #{head_forward.1} parent=0 // loop_footer_branch
    %7 = sbr.rel target = $region3
  $region8: #{head_forward.1} parent=0 // loop_exit
    _

</llo_original>
